<compile_context>
chip_gen: v7x
topology: tpu7x:2x2x1
jax: 0.10.0
libtpu: 0.0.40
codegen_flags: <defaults>
</compile_context>

<pallas_src>
import functools

import jax
import jax.numpy as jnp
from jax.experimental import pallas as pl
from jax.experimental.pallas import tpu as pltpu


def _tpu_generation():
    """Best-effort TPU generation from device_kind (0 if unknown)."""
    try:
        kind = jax.devices()[0].device_kind.lower()
    except Exception:  # pragma: no cover - defensive
        return 0
    for g in (7, 6, 5, 4, 3, 2):
        if f"v{g}" in kind:
            return g
    return 0


def _vmem_limit_bytes(gen):
    # v5e / v6e have 128 MiB VMEM -> use ~100 MB; v7x has 64 MiB -> stay at 48.
    if gen in (5, 6):
        return 100 * 1024 * 1024
    return 48 * 1024 * 1024


# ----------------------------------------------------------------------------
# Kernel 1: qkv projection.  One (tq, C) x (C, C) GEMM per qkv group per grid
# step (grid is just (B, nQ)); the (3, B*nh, S, hd) head-major layout that the
# attention kernel wants is produced with static lane-slice stores.
# ----------------------------------------------------------------------------
def _qkv_kernel(x_ref, w_ref, b_ref, o_ref, *, num_heads, head_dim,
                compute_dtype):
    nh, hd = num_heads, head_dim
    C = nh * hd
    x = x_ref[0].astype(compute_dtype)                                # (tq, C)
    for j in range(3):                                                # q, k, v
        yj = jnp.dot(x, w_ref[:, j * C:(j + 1) * C],
                     preferred_element_type=jnp.float32)              # (tq, C)
        yj = (yj + b_ref[:, j * C:(j + 1) * C]).astype(o_ref.dtype)
        for h in range(nh):
            o_ref[j, h] = yj[:, h * hd:(h + 1) * hd]


def qkv_projection(x3, w, b, *, num_heads, tq, compute_dtype, vmem_limit):
    """x3: (B, S, C) fp32. w: (C, 3C) compute_dtype (scale already folded into
    the q columns). b: (1, 3C) fp32.  Returns qkv as (3, B*num_heads, S, hd)."""
    B, S, C = x3.shape
    nh = num_heads
    hd = C // nh
    nQ = S // tq
    return pl.pallas_call(
        functools.partial(_qkv_kernel, num_heads=nh, head_dim=hd,
                          compute_dtype=compute_dtype),
        out_shape=jax.ShapeDtypeStruct((3, B * nh, S, hd), compute_dtype),
        grid=(B, nQ),
        in_specs=[
            pl.BlockSpec((1, tq, C), lambda bi, qi: (bi, qi, 0)),
            pl.BlockSpec((C, 3 * C), lambda bi, qi: (0, 0)),   # resident weight
            pl.BlockSpec((1, 3 * C), lambda bi, qi: (0, 0)),
        ],
        out_specs=pl.BlockSpec((3, nh, tq, hd), lambda bi, qi: (0, bi, qi, 0)),
        compiler_params=pltpu.CompilerParams(
            dimension_semantics=("parallel", "parallel"),
            vmem_limit_bytes=vmem_limit),
        cost_estimate=pl.CostEstimate(
            flops=int(2 * B * S * C * 3 * C),
            transcendentals=0,
            bytes_accessed=int(4 * B * S * C + 2 * 3 * C * C + 2 * 3 * B * S * C)),
    )(x3, w, b)


# ----------------------------------------------------------------------------
# Kernel 2: fused flash-style attention with on-chip decomposed rel-pos bias.
# Output is written directly in lane-dense (B, S, C) layout.
# ----------------------------------------------------------------------------
def _flash_attn_kernel(*refs, use_rel_pos, compute_dtype, exp_dtype, head_dim):
    if use_rel_pos:
        (q_ref, k_ref, v_ref, rhw_ref, ehw_ref,
         o_ref, m_sc, l_sc, acc_sc) = refs
    else:
        q_ref, k_ref, v_ref, o_ref, m_sc, l_sc, acc_sc = refs

    kv_i = pl.program_id(2)

    @pl.when(kv_i == 0)
    def _():
        m_sc[...] = jnp.full(m_sc.shape, -jnp.inf, m_sc.dtype)
        l_sc[...] = jnp.zeros(l_sc.shape, l_sc.dtype)
        acc_sc[...] = jnp.zeros(acc_sc.shape, acc_sc.dtype)

    # q already carries the 1/sqrt(hd) scale (folded into the qkv weight).
    q = q_ref[0]                                               # (nh, tq, hd)
    k = k_ref[0]                                               # (nh, tk, hd)
    v = v_ref[0]                                               # (nh, tk, hd)

    s = jnp.einsum("hqd,hkd->hqk", q, k,
                   preferred_element_type=jnp.float32)         # (nh, tq, tk)

    if use_rel_pos:
        # bias[h, q, col] = rel_h[h, q, col // W] + rel_w[h, q, col % W],
        # expanded on-chip as a single bf16 matmul against the concatenated
        # 0/1 expansion matrix (H+W, tk).  No (B*nh, S, S) bias in HBM, no
        # per-step broadcasts, no fp32 multi-pass matmuls.
        rhw = rhw_ref[...]                                     # (nh, tq, H+W)
        ehw = ehw_ref[...]                                     # (H+W, tk)
        nh_, tq_, cc_ = rhw.shape
        bias = jnp.dot(rhw.reshape(nh_ * tq_, cc_), ehw,
                       preferred_element_type=jnp.float32)
        s = s + bias.reshape(nh_, tq_, -1)

    m_prev = m_sc[...]
    m_new = jnp.maximum(m_prev, jnp.max(s, axis=-1, keepdims=True))
    alpha = jnp.exp(m_prev - m_new)                            # fp32
    p = jnp.exp((s - m_new).astype(exp_dtype))                 # bf16 on v6e/v7x
    l_sc[...] = alpha * l_sc[...] + jnp.sum(
        p.astype(jnp.float32), axis=-1, keepdims=True)
    acc_sc[...] = alpha * acc_sc[...] + jnp.einsum(
        "hqk,hkd->hqd", p.astype(compute_dtype), v,
        preferred_element_type=jnp.float32)
    m_sc[...] = m_new

    @pl.when(kv_i == pl.num_programs(2) - 1)
    def _():
        inv_l = pl.reciprocal(l_sc[...], approx=True)          # EUP, not VALU
        out = (acc_sc[...] * inv_l).astype(o_ref.dtype)        # (nh, tq, hd)
        hd = head_dim
        for h in range(out.shape[0]):
            # Per-head lane-slice stores -> lane-dense (tq, C) output block.
            o_ref[0, :, h * hd:(h + 1) * hd] = out[h]


def attention_core(qkv, rel_args, *, B, num_heads, H, W, tq, tk,
                   compute_dtype, exp_dtype, vmem_limit):
    """qkv: (3, B*nh, S, hd). Returns attention output as (B, S, C)."""
    nh = num_heads
    S = H * W
    hd = qkv.shape[-1]
    C = nh * hd
    nQ, nKV = S // tq, S // tk
    use_rel_pos = rel_args is not None

    in_specs = [
        pl.BlockSpec((1, nh, tq, hd), lambda bi, qi, ki: (0, bi, qi, 0)),  # q
        pl.BlockSpec((1, nh, tk, hd), lambda bi, qi, ki: (1, bi, ki, 0)),  # k
        pl.BlockSpec((1, nh, tk, hd), lambda bi, qi, ki: (2, bi, ki, 0)),  # v
    ]
    args = [qkv, qkv, qkv]
    if use_rel_pos:
        rel_hw, e_hw = rel_args            # (B*nh, S, H+W) bf16, (H+W, S) bf16
        in_specs += [
            pl.BlockSpec((nh, tq, H + W), lambda bi, qi, ki: (bi, qi, 0)),
            pl.BlockSpec((H + W, tk), lambda bi, qi, ki: (0, ki)),
        ]
        args += [rel_hw, e_hw]

    return pl.pallas_call(
        functools.partial(_flash_attn_kernel, use_rel_pos=use_rel_pos,
                          compute_dtype=compute_dtype, exp_dtype=exp_dtype,
                          head_dim=hd),
        out_shape=jax.ShapeDtypeStruct((B, S, C), compute_dtype),
        grid=(B, nQ, nKV),
        in_specs=in_specs,
        out_specs=pl.BlockSpec((1, tq, C), lambda bi, qi, ki: (bi, qi, 0)),
        scratch_shapes=[
            pltpu.VMEM((nh, tq, 1), jnp.float32),     # running max
            pltpu.VMEM((nh, tq, 1), jnp.float32),     # running sum
            pltpu.VMEM((nh, tq, hd), jnp.float32),    # output accumulator
        ],
        compiler_params=pltpu.CompilerParams(
            dimension_semantics=("parallel", "parallel", "arbitrary"),
            vmem_limit_bytes=vmem_limit),
        cost_estimate=pl.CostEstimate(
            flops=int(4 * B * nh * S * S * hd + 2 * B * nh * S * S * (H + W)),
            transcendentals=int(B * nh * S * S),
            bytes_accessed=int(8 * B * nh * S * hd)),
    )(*args)


# ----------------------------------------------------------------------------
# Kernel 3: output projection.  Lane-dense (tq, C) x (C, C) GEMM per tile,
# no head-reduction grid axis, no accumulator scratch.
# ----------------------------------------------------------------------------
def _proj_kernel(o_ref, w_ref, b_ref, y_ref):
    acc = jnp.dot(o_ref[0], w_ref[...], preferred_element_type=jnp.float32)
    y_ref[0] = (acc + b_ref[...]).astype(y_ref.dtype)


def output_projection(o, w_proj, b_proj, *, tq, compute_dtype, out_dtype,
                      vmem_limit):
    B, S, C = o.shape
    nQ = S // tq
    w = w_proj.T.astype(compute_dtype)             # (C_in, C_out)
    b = b_proj.reshape(1, C).astype(jnp.float32)
    return pl.pallas_call(
        _proj_kernel,
        out_shape=jax.ShapeDtypeStruct((B, S, C), out_dtype),
        grid=(B, nQ),
        in_specs=[
            pl.BlockSpec((1, tq, C), lambda bi, qi: (bi, qi, 0)),
            pl.BlockSpec((C, C), lambda bi, qi: (0, 0)),       # resident weight
            pl.BlockSpec((1, C), lambda bi, qi: (0, 0)),
        ],
        out_specs=pl.BlockSpec((1, tq, C), lambda bi, qi: (bi, qi, 0)),
        compiler_params=pltpu.CompilerParams(
            dimension_semantics=("parallel", "parallel"),
            vmem_limit_bytes=vmem_limit),
        cost_estimate=pl.CostEstimate(
            flops=int(2 * B * S * C * C),
            transcendentals=0,
            bytes_accessed=int(2 * B * S * C + 2 * C * C + 4 * B * S * C)),
    )(o, w, b)


# ----------------------------------------------------------------------------
# Relative-position glue (mirrors get_rel_pos / add_decomposed_rel_pos terms)
# ----------------------------------------------------------------------------
def get_rel_pos(q_size, k_size, rel_pos):
    max_rel_dist = int(2 * max(q_size, k_size) - 1)
    # TODO(synk): F.interpolate(mode='linear') resize branch not implemented;
    # rel_pos tables are always constructed with shape (2*size-1, head_dim).
    assert rel_pos.shape[0] == max_rel_dist
    q_coords = jnp.arange(q_size)[:, None] * max(k_size / q_size, 1.0)
    k_coords = jnp.arange(k_size)[None, :] * max(q_size / k_size, 1.0)
    relative_coords = q_coords - k_coords + (k_size - 1) * max(q_size / k_size, 1.0)
    return rel_pos[relative_coords.astype(jnp.int32)]  # (q_size, k_size, hd)


def decomposed_rel_terms(q, rel_pos_h, rel_pos_w, q_size, k_size,
                         precision=None):
    """Small decomposed terms: rel_h (B*nh, S, k_h), rel_w (B*nh, S, k_w)."""
    q_h, q_w = q_size
    k_h, k_w = k_size
    Rh = get_rel_pos(q_h, k_h, rel_pos_h)
    Rw = get_rel_pos(q_w, k_w, rel_pos_w)
    Bn, _, dim = q.shape
    r_q = q.reshape(Bn, q_h, q_w, dim).astype(jnp.float32)
    rel_h = jnp.einsum("bhwc,hkc->bhwk", r_q, Rh, precision=precision)
    rel_w = jnp.einsum("bhwc,wkc->bhwk", r_q, Rw, precision=precision)
    return rel_h.reshape(Bn, q_h * q_w, k_h), rel_w.reshape(Bn, q_h * q_w, k_w)


# ----------------------------------------------------------------------------
# Full forward (Pallas-backed)
# ----------------------------------------------------------------------------
def attention_vit_forward(x, params, num_heads, use_rel_pos=True,
                          compute_dtype=jnp.bfloat16):
    B, H, W, C = x.shape
    nh = num_heads
    hd = C // nh
    S = H * W
    scale = hd ** -0.5

    gen = _tpu_generation()
    vmem_limit = _vmem_limit_bytes(gen)
    # bf16 exp on v6e/v7x (EUP bf16); fp32 exp on v5e / older / unknown.
    exp_dtype = jnp.bfloat16 if gen >= 6 else jnp.float32

    # Q / KV tile sizes: full-S blocks for windowed attention; flash-style KV
    # tiling for large S (SAM global attention).  Bigger KV tiles on the
    # 128 MiB-VMEM parts (v5e/v6e), conservative tiles on v7x (64 MiB VMEM).
    tq = S if S <= 256 else 256
    if S <= 512:
        tk = S
    elif gen in (5, 6) and S % 1024 == 0:
        tk = 1024
    else:
        tk = 512
    assert S % tq == 0 and S % tk == 0, "large S must tile by the chosen (tq, tk)"

    x3 = x.reshape(B, S, C)

    # qkv weights: torch (3C, C) -> (C, 3C); fold the 1/sqrt(hd) scale into the
    # q columns (and q bias) so the attention kernel uses q directly.
    col_scale = jnp.concatenate([jnp.full((C,), scale, jnp.float32),
                                 jnp.ones((2 * C,), jnp.float32)])
    w_qkv = (params["w_qkv"].T * col_scale[None, :]).astype(compute_dtype)
    b_qkv = (params["b_qkv"] * col_scale).reshape(1, 3 * C).astype(jnp.float32)

    qkv = qkv_projection(x3, w_qkv, b_qkv, num_heads=nh, tq=tq,
                         compute_dtype=compute_dtype, vmem_limit=vmem_limit)

    rel_args = None
    if use_rel_pos:  # static flag: no zero bias tensor is ever built/DMA'd
        q = qkv[0].astype(jnp.float32)  # (B*nh, S, hd) -- scaled q, tiny glue
        # q carries the folded scale; compensate on the rel-pos tables so the
        # decomposed bias matches the unscaled-q reference math.
        rel_h, rel_w = decomposed_rel_terms(
            q, params["rel_pos_h"] / scale, params["rel_pos_w"] / scale,
            (H, W), (H, W))
        rel_hw = jnp.concatenate([rel_h, rel_w], axis=-1).astype(compute_dtype)
        cols = jnp.arange(S)
        eh = (cols[None, :] // W == jnp.arange(H)[:, None])
        ew = (cols[None, :] % W == jnp.arange(W)[:, None])
        e_hw = jnp.concatenate([eh, ew], axis=0).astype(compute_dtype)  # (H+W,S)
        rel_args = (rel_hw, e_hw)

    o = attention_core(qkv, rel_args, B=B, num_heads=nh, H=H, W=W,
                       tq=tq, tk=tk, compute_dtype=compute_dtype,
                       exp_dtype=exp_dtype, vmem_limit=vmem_limit)  # (B, S, C)

    y = output_projection(o, params["w_proj"], params["b_proj"], tq=tq,
                          compute_dtype=compute_dtype, out_dtype=x.dtype,
                          vmem_limit=vmem_limit)
    return y.reshape(B, H, W, C)


# ----------------------------------------------------------------------------
# Pure-JAX fp32 reference (mirrors the torch forward) for verification
# ----------------------------------------------------------------------------
def reference_forward(x, params, num_heads, use_rel_pos=True):
    B, H, W, C = x.shape
    nh = num_heads
    hd = C // nh
    S = H * W
    scale = hd ** -0.5
    qkv = (jnp.einsum("bhwc,dc->bhwd", x, params["w_qkv"], precision="highest")
           + params["b_qkv"])
    qkv = (qkv.reshape(B, S, 3, nh, hd).transpose(2, 0, 3, 1, 4)
           .reshape(3, B * nh, S, hd))
    q, k, v = qkv[0], qkv[1], qkv[2]
    attn = jnp.einsum("bqd,bkd->bqk", q * scale, k, precision="highest")
    if use_rel_pos:
        rel_h, rel_w = decomposed_rel_terms(
            q, params["rel_pos_h"], params["rel_pos_w"], (H, W), (H, W),
            precision="highest")
        attn = attn + (rel_h[:, :, :, None] + rel_w[:, :, None, :]).reshape(
            B * nh, S, S)
    attn = jax.nn.softmax(attn, axis=-1)
    o = jnp.einsum("bqk,bkd->bqd", attn, v, precision="highest")
    o = o.reshape(B, nh, H, W, hd).transpose(0, 2, 3, 1, 4).reshape(B, S, C)
    out = (jnp.einsum("bsc,dc->bsd", o, params["w_proj"], precision="highest")
           + params["b_proj"])
    return out.reshape(B, H, W, C)


# ----------------------------------------------------------------------------
# Main
# ----------------------------------------------------------------------------
if __name__ == "__main__":
    B, H, W, C = 2, 8, 8, 64        # one 8x8 window per batch element
    num_heads = 4
    head_dim = C // num_heads

    key = jax.random.PRNGKey(0)
    k_x, k0, k1, k2, k3, k4, k5 = jax.random.split(key, 7)

    x = jax.random.normal(k_x, (B, H, W, C), jnp.float32)
    params = {
        # torch nn.Linear layout: weight (out_features, in_features)
        "w_qkv": jax.random.normal(k0, (3 * C, C), jnp.float32) * 0.05,
        "b_qkv": jax.random.normal(k1, (3 * C,), jnp.float32) * 0.05,
        "w_proj": jax.random.normal(k2, (C, C), jnp.float32) * 0.05,
        "b_proj": jax.random.normal(k3, (C,), jnp.float32) * 0.05,
        # rel_pos tables: (2*size - 1, head_dim); nonzero for a meaningful test
        "rel_pos_h": jax.random.normal(k4, (2 * H - 1, head_dim), jnp.float32) * 0.05,
        "rel_pos_w": jax.random.normal(k5, (2 * W - 1, head_dim), jnp.float32) * 0.05,
    }

    for use_rel_pos in (True, False):
        out = attention_vit_forward(x, params, num_heads, use_rel_pos=use_rel_pos)
        out = jax.block_until_ready(out)
        ref = reference_forward(x, params, num_heads, use_rel_pos=use_rel_pos)
        assert out.shape == (B, H, W, C)
        max_err = float(jnp.max(jnp.abs(out - ref)))
        # bf16 MXU inputs (and bf16 exp on v6e/v7x) with fp32 accumulation and
        # fp32 softmax statistics; approx reciprocal in the normalization.
        assert jnp.allclose(out, ref, rtol=5e-2, atol=2e-2), max_err

    print("KERNEL_OK")
</pallas_src>

<mosaic_0001>
module attributes {stable_mosaic.version = 11 : i64} {
  func.func @_qkv_kernel(%arg0: i32, %arg1: i32, %arg2: memref<1x64x64xf32, #tpu.memory_space<vmem>>, %arg3: memref<64x192xbf16, #tpu.memory_space<vmem>>, %arg4: memref<1x192xf32, #tpu.memory_space<vmem>>, %arg5: memref<3x4x64x16xbf16, #tpu.memory_space<vmem>>) attributes {dimension_semantics = [#tpu.dimension_semantics<parallel>, #tpu.dimension_semantics<parallel>], iteration_bounds = array<i64: 2, 1>, scalar_prefetch = 0 : i64, scratch_operands = 0 : i64, tpu.core_type = #tpu.core_type<tc>, window_params = [{transform_indices = @transform_0, window_bounds = array<i64: 1, 64, 64>}, {pipeline_mode = #tpu.pipeline_mode<synchronous>, transform_indices = @transform_1, window_bounds = array<i64: 64, 192>}, {pipeline_mode = #tpu.pipeline_mode<synchronous>, transform_indices = @transform_2, window_bounds = array<i64: 1, 192>}, {transform_indices = @transform_3, window_bounds = array<i64: 3, 4, 64, 16>}]} {
    %c0 = arith.constant 0 : index
    %c0_0 = arith.constant 0 : index
    %c0_1 = arith.constant 0 : index
    %0 = vector.load %arg2[%c0, %c0_0, %c0_1] : memref<1x64x64xf32, #tpu.memory_space<vmem>>, vector<1x64x64xf32>
    %1 = vector.shape_cast %0 : vector<1x64x64xf32> to vector<64x64xf32>
    %2 = arith.truncf %1 : vector<64x64xf32> to vector<64x64xbf16>
    %c0_2 = arith.constant 0 : index
    %c0_3 = arith.constant 0 : index
    %3 = vector.load %arg3[%c0_2, %c0_3] : memref<64x192xbf16, #tpu.memory_space<vmem>>, vector<64x64xbf16>
    %cst = arith.constant dense<0.000000e+00> : vector<64x64xf32>
    %4 = tpu.matmul %2, %3, %cst {dimension_numbers = #tpu.dot_dimension_numbers<[1], [0], [0], [1], [0, 0, 1, 1], [], []>} : vector<64x64xbf16>, vector<64x64xbf16>, vector<64x64xf32> -> vector<64x64xf32>
    %c0_4 = arith.constant 0 : index
    %c0_5 = arith.constant 0 : index
    %5 = vector.load %arg4[%c0_4, %c0_5] : memref<1x192xf32, #tpu.memory_space<vmem>>, vector<1x64xf32>
    %6 = vector.broadcast %5 : vector<1x64xf32> to vector<64x64xf32>
    %7 = arith.addf %4, %6 : vector<64x64xf32>
    %8 = arith.truncf %7 : vector<64x64xf32> to vector<64x64xbf16>
    %9 = vector.extract_strided_slice %8 {offsets = [0, 0], sizes = [64, 16], strides = [1, 1]} : vector<64x64xbf16> to vector<64x16xbf16>
    %c0_6 = arith.constant 0 : index
    %c0_7 = arith.constant 0 : index
    %c0_8 = arith.constant 0 : index
    %c0_9 = arith.constant 0 : index
    %10 = vector.load %arg5[%c0_6, %c0_7, %c0_8, %c0_9] : memref<3x4x64x16xbf16, #tpu.memory_space<vmem>>, vector<1x1x64x16xbf16>
    %11 = vector.shape_cast %10 : vector<1x1x64x16xbf16> to vector<64x16xbf16>
    %12 = vector.shape_cast %9 : vector<64x16xbf16> to vector<1x1x64x16xbf16>
    tpu.vector_store %arg5[%c0_6, %c0_7, %c0_8, %c0_9], %12 {strides = array<i32>} : memref<3x4x64x16xbf16, #tpu.memory_space<vmem>>, vector<1x1x64x16xbf16>,
    %13 = vector.extract_strided_slice %8 {offsets = [0, 16], sizes = [64, 16], strides = [1, 1]} : vector<64x64xbf16> to vector<64x16xbf16>
    %c0_10 = arith.constant 0 : index
    %c1 = arith.constant 1 : index
    %c0_11 = arith.constant 0 : index
    %c0_12 = arith.constant 0 : index
    %14 = vector.load %arg5[%c0_10, %c1, %c0_11, %c0_12] : memref<3x4x64x16xbf16, #tpu.memory_space<vmem>>, vector<1x1x64x16xbf16>
    %15 = vector.shape_cast %14 : vector<1x1x64x16xbf16> to vector<64x16xbf16>
    %16 = vector.shape_cast %13 : vector<64x16xbf16> to vector<1x1x64x16xbf16>
    tpu.vector_store %arg5[%c0_10, %c1, %c0_11, %c0_12], %16 {strides = array<i32>} : memref<3x4x64x16xbf16, #tpu.memory_space<vmem>>, vector<1x1x64x16xbf16>,
    %17 = vector.extract_strided_slice %8 {offsets = [0, 32], sizes = [64, 16], strides = [1, 1]} : vector<64x64xbf16> to vector<64x16xbf16>
    %c0_13 = arith.constant 0 : index
    %c2 = arith.constant 2 : index
    %c0_14 = arith.constant 0 : index
    %c0_15 = arith.constant 0 : index
    %18 = vector.load %arg5[%c0_13, %c2, %c0_14, %c0_15] : memref<3x4x64x16xbf16, #tpu.memory_space<vmem>>, vector<1x1x64x16xbf16>
    %19 = vector.shape_cast %18 : vector<1x1x64x16xbf16> to vector<64x16xbf16>
    %20 = vector.shape_cast %17 : vector<64x16xbf16> to vector<1x1x64x16xbf16>
    tpu.vector_store %arg5[%c0_13, %c2, %c0_14, %c0_15], %20 {strides = array<i32>} : memref<3x4x64x16xbf16, #tpu.memory_space<vmem>>, vector<1x1x64x16xbf16>,
    %21 = vector.extract_strided_slice %8 {offsets = [0, 48], sizes = [64, 16], strides = [1, 1]} : vector<64x64xbf16> to vector<64x16xbf16>
    %c0_16 = arith.constant 0 : index
    %c3 = arith.constant 3 : index
    %c0_17 = arith.constant 0 : index
    %c0_18 = arith.constant 0 : index
    %22 = vector.load %arg5[%c0_16, %c3, %c0_17, %c0_18] : memref<3x4x64x16xbf16, #tpu.memory_space<vmem>>, vector<1x1x64x16xbf16>
    %23 = vector.shape_cast %22 : vector<1x1x64x16xbf16> to vector<64x16xbf16>
    %24 = vector.shape_cast %21 : vector<64x16xbf16> to vector<1x1x64x16xbf16>
    tpu.vector_store %arg5[%c0_16, %c3, %c0_17, %c0_18], %24 {strides = array<i32>} : memref<3x4x64x16xbf16, #tpu.memory_space<vmem>>, vector<1x1x64x16xbf16>,
    %c0_19 = arith.constant 0 : index
    %c64 = arith.constant 64 : index
    %25 = vector.load %arg3[%c0_19, %c64] : memref<64x192xbf16, #tpu.memory_space<vmem>>, vector<64x64xbf16>
    %cst_20 = arith.constant dense<0.000000e+00> : vector<64x64xf32>
    %26 = tpu.matmul %2, %25, %cst_20 {dimension_numbers = #tpu.dot_dimension_numbers<[1], [0], [0], [1], [0, 0, 1, 1], [], []>} : vector<64x64xbf16>, vector<64x64xbf16>, vector<64x64xf32> -> vector<64x64xf32>
    %c0_21 = arith.constant 0 : index
    %c64_22 = arith.constant 64 : index
    %27 = vector.load %arg4[%c0_21, %c64_22] : memref<1x192xf32, #tpu.memory_space<vmem>>, vector<1x64xf32>
    %28 = vector.broadcast %27 : vector<1x64xf32> to vector<64x64xf32>
    %29 = arith.addf %26, %28 : vector<64x64xf32>
    %30 = arith.truncf %29 : vector<64x64xf32> to vector<64x64xbf16>
    %31 = vector.extract_strided_slice %30 {offsets = [0, 0], sizes = [64, 16], strides = [1, 1]} : vector<64x64xbf16> to vector<64x16xbf16>
    %c1_23 = arith.constant 1 : index
    %c0_24 = arith.constant 0 : index
    %c0_25 = arith.constant 0 : index
    %c0_26 = arith.constant 0 : index
    %32 = vector.load %arg5[%c1_23, %c0_24, %c0_25, %c0_26] : memref<3x4x64x16xbf16, #tpu.memory_space<vmem>>, vector<1x1x64x16xbf16>
    %33 = vector.shape_cast %32 : vector<1x1x64x16xbf16> to vector<64x16xbf16>
    %34 = vector.shape_cast %31 : vector<64x16xbf16> to vector<1x1x64x16xbf16>
    tpu.vector_store %arg5[%c1_23, %c0_24, %c0_25, %c0_26], %34 {strides = array<i32>} : memref<3x4x64x16xbf16, #tpu.memory_space<vmem>>, vector<1x1x64x16xbf16>,
    %35 = vector.extract_strided_slice %30 {offsets = [0, 16], sizes = [64, 16], strides = [1, 1]} : vector<64x64xbf16> to vector<64x16xbf16>
    %c1_27 = arith.constant 1 : index
    %c1_28 = arith.constant 1 : index
    %c0_29 = arith.constant 0 : index
    %c0_30 = arith.constant 0 : index
    %36 = vector.load %arg5[%c1_27, %c1_28, %c0_29, %c0_30] : memref<3x4x64x16xbf16, #tpu.memory_space<vmem>>, vector<1x1x64x16xbf16>
    %37 = vector.shape_cast %36 : vector<1x1x64x16xbf16> to vector<64x16xbf16>
    %38 = vector.shape_cast %35 : vector<64x16xbf16> to vector<1x1x64x16xbf16>
    tpu.vector_store %arg5[%c1_27, %c1_28, %c0_29, %c0_30], %38 {strides = array<i32>} : memref<3x4x64x16xbf16, #tpu.memory_space<vmem>>, vector<1x1x64x16xbf16>,
    %39 = vector.extract_strided_slice %30 {offsets = [0, 32], sizes = [64, 16], strides = [1, 1]} : vector<64x64xbf16> to vector<64x16xbf16>
    %c1_31 = arith.constant 1 : index
    %c2_32 = arith.constant 2 : index
    %c0_33 = arith.constant 0 : index
    %c0_34 = arith.constant 0 : index
    %40 = vector.load %arg5[%c1_31, %c2_32, %c0_33, %c0_34] : memref<3x4x64x16xbf16, #tpu.memory_space<vmem>>, vector<1x1x64x16xbf16>
    %41 = vector.shape_cast %40 : vector<1x1x64x16xbf16> to vector<64x16xbf16>
    %42 = vector.shape_cast %39 : vector<64x16xbf16> to vector<1x1x64x16xbf16>
    tpu.vector_store %arg5[%c1_31, %c2_32, %c0_33, %c0_34], %42 {strides = array<i32>} : memref<3x4x64x16xbf16, #tpu.memory_space<vmem>>, vector<1x1x64x16xbf16>,
    %43 = vector.extract_strided_slice %30 {offsets = [0, 48], sizes = [64, 16], strides = [1, 1]} : vector<64x64xbf16> to vector<64x16xbf16>
    %c1_35 = arith.constant 1 : index
    %c3_36 = arith.constant 3 : index
    %c0_37 = arith.constant 0 : index
    %c0_38 = arith.constant 0 : index
    %44 = vector.load %arg5[%c1_35, %c3_36, %c0_37, %c0_38] : memref<3x4x64x16xbf16, #tpu.memory_space<vmem>>, vector<1x1x64x16xbf16>
    %45 = vector.shape_cast %44 : vector<1x1x64x16xbf16> to vector<64x16xbf16>
    %46 = vector.shape_cast %43 : vector<64x16xbf16> to vector<1x1x64x16xbf16>
    tpu.vector_store %arg5[%c1_35, %c3_36, %c0_37, %c0_38], %46 {strides = array<i32>} : memref<3x4x64x16xbf16, #tpu.memory_space<vmem>>, vector<1x1x64x16xbf16>,
    %c0_39 = arith.constant 0 : index
    %c128 = arith.constant 128 : index
    %47 = vector.load %arg3[%c0_39, %c128] : memref<64x192xbf16, #tpu.memory_space<vmem>>, vector<64x64xbf16>
    %cst_40 = arith.constant dense<0.000000e+00> : vector<64x64xf32>
    %48 = tpu.matmul %2, %47, %cst_40 {dimension_numbers = #tpu.dot_dimension_numbers<[1], [0], [0], [1], [0, 0, 1, 1], [], []>} : vector<64x64xbf16>, vector<64x64xbf16>, vector<64x64xf32> -> vector<64x64xf32>
    %c0_41 = arith.constant 0 : index
    %c128_42 = arith.constant 128 : index
    %49 = vector.load %arg4[%c0_41, %c128_42] : memref<1x192xf32, #tpu.memory_space<vmem>>, vector<1x64xf32>
    %50 = vector.broadcast %49 : vector<1x64xf32> to vector<64x64xf32>
    %51 = arith.addf %48, %50 : vector<64x64xf32>
    %52 = arith.truncf %51 : vector<64x64xf32> to vector<64x64xbf16>
    %53 = vector.extract_strided_slice %52 {offsets = [0, 0], sizes = [64, 16], strides = [1, 1]} : vector<64x64xbf16> to vector<64x16xbf16>
    %c2_43 = arith.constant 2 : index
    %c0_44 = arith.constant 0 : index
    %c0_45 = arith.constant 0 : index
    %c0_46 = arith.constant 0 : index
    %54 = vector.load %arg5[%c2_43, %c0_44, %c0_45, %c0_46] : memref<3x4x64x16xbf16, #tpu.memory_space<vmem>>, vector<1x1x64x16xbf16>
    %55 = vector.shape_cast %54 : vector<1x1x64x16xbf16> to vector<64x16xbf16>
    %56 = vector.shape_cast %53 : vector<64x16xbf16> to vector<1x1x64x16xbf16>
    tpu.vector_store %arg5[%c2_43, %c0_44, %c0_45, %c0_46], %56 {strides = array<i32>} : memref<3x4x64x16xbf16, #tpu.memory_space<vmem>>, vector<1x1x64x16xbf16>,
    %57 = vector.extract_strided_slice %52 {offsets = [0, 16], sizes = [64, 16], strides = [1, 1]} : vector<64x64xbf16> to vector<64x16xbf16>
    %c2_47 = arith.constant 2 : index
    %c1_48 = arith.constant 1 : index
    %c0_49 = arith.constant 0 : index
    %c0_50 = arith.constant 0 : index
    %58 = vector.load %arg5[%c2_47, %c1_48, %c0_49, %c0_50] : memref<3x4x64x16xbf16, #tpu.memory_space<vmem>>, vector<1x1x64x16xbf16>
    %59 = vector.shape_cast %58 : vector<1x1x64x16xbf16> to vector<64x16xbf16>
    %60 = vector.shape_cast %57 : vector<64x16xbf16> to vector<1x1x64x16xbf16>
    tpu.vector_store %arg5[%c2_47, %c1_48, %c0_49, %c0_50], %60 {strides = array<i32>} : memref<3x4x64x16xbf16, #tpu.memory_space<vmem>>, vector<1x1x64x16xbf16>,
    %61 = vector.extract_strided_slice %52 {offsets = [0, 32], sizes = [64, 16], strides = [1, 1]} : vector<64x64xbf16> to vector<64x16xbf16>
    %c2_51 = arith.constant 2 : index
    %c2_52 = arith.constant 2 : index
    %c0_53 = arith.constant 0 : index
    %c0_54 = arith.constant 0 : index
    %62 = vector.load %arg5[%c2_51, %c2_52, %c0_53, %c0_54] : memref<3x4x64x16xbf16, #tpu.memory_space<vmem>>, vector<1x1x64x16xbf16>
    %63 = vector.shape_cast %62 : vector<1x1x64x16xbf16> to vector<64x16xbf16>
    %64 = vector.shape_cast %61 : vector<64x16xbf16> to vector<1x1x64x16xbf16>
    tpu.vector_store %arg5[%c2_51, %c2_52, %c0_53, %c0_54], %64 {strides = array<i32>} : memref<3x4x64x16xbf16, #tpu.memory_space<vmem>>, vector<1x1x64x16xbf16>,
    %65 = vector.extract_strided_slice %52 {offsets = [0, 48], sizes = [64, 16], strides = [1, 1]} : vector<64x64xbf16> to vector<64x16xbf16>
    %c2_55 = arith.constant 2 : index
    %c3_56 = arith.constant 3 : index
    %c0_57 = arith.constant 0 : index
    %c0_58 = arith.constant 0 : index
    %66 = vector.load %arg5[%c2_55, %c3_56, %c0_57, %c0_58] : memref<3x4x64x16xbf16, #tpu.memory_space<vmem>>, vector<1x1x64x16xbf16>
    %67 = vector.shape_cast %66 : vector<1x1x64x16xbf16> to vector<64x16xbf16>
    %68 = vector.shape_cast %65 : vector<64x16xbf16> to vector<1x1x64x16xbf16>
    tpu.vector_store %arg5[%c2_55, %c3_56, %c0_57, %c0_58], %68 {strides = array<i32>} : memref<3x4x64x16xbf16, #tpu.memory_space<vmem>>, vector<1x1x64x16xbf16>,
    return
  }
  func.func @transform_0(%arg0: i32, %arg1: i32) -> (i32, i32, i32) {
    %c0_i32 = arith.constant 0 : i32
    %c0_i32_0 = arith.constant 0 : i32
    return %arg0, %arg1, %c0_i32 : i32, i32, i32
  }
  func.func @transform_1(%arg0: i32, %arg1: i32) -> (i32, i32) {
    %c0_i32 = arith.constant 0 : i32
    %c0_i32_0 = arith.constant 0 : i32
    %c0_i32_1 = arith.constant 0 : i32
    return %c0_i32, %c0_i32_0 : i32, i32
  }
  func.func @transform_2(%arg0: i32, %arg1: i32) -> (i32, i32) {
    %c0_i32 = arith.constant 0 : i32
    %c0_i32_0 = arith.constant 0 : i32
    %c0_i32_1 = arith.constant 0 : i32
    return %c0_i32, %c0_i32_0 : i32, i32
  }
  func.func @transform_3(%arg0: i32, %arg1: i32) -> (i32, i32, i32, i32) {
    %c0_i32 = arith.constant 0 : i32
    %c0_i32_0 = arith.constant 0 : i32
    %c0_i32_1 = arith.constant 0 : i32
    return %c0_i32, %arg0, %arg1, %c0_i32_0 : i32, i32, i32, i32
  }
}

</mosaic_0001>

<llo_original>
// kernel: tpu_custom_call.1
$region0: #{tpu_custom_call.1}
  #allocation0 [shape = 'u32[]', space=smem, size = 0x4, offset = 0x4, fixed_abs, tag = 'smem constant byte address 0x4 - core index']
  #allocation1 [shape = 'u32[144,128]{1,0:T(1,128)}', space=vmem, size = 0x12000, scoped, tag = 'internal scratch']
  %s0 = inlined_call_operand.hbm [shape: f32[2,64,64], index: 0, kind: input, shape index: {}]
  %s1 = inlined_call_operand.hbm [shape: bf16[64,192], index: 1, kind: input, shape index: {}]
  %s2 = inlined_call_operand.vmem [shape: f32[1,192], index: 2, kind: input, shape index: {}]
  %s3 = inlined_call_operand.vmem [shape: bf16[3,8,64,16], index: 3, kind: output, shape index: {}]
  %s4 = sld [smem:[#allocation0]]
  $region90: #{tpu_custom_call.1} parent=0
    _
  %s6 = ssub.s32 1, %s4
  %s7 = scalar_select 0, %s6, %s4
  $region1: #{tpu_custom_call.1} parent=0
    #allocation2 [shape = 'u8[65536]{0}', space=vmem, size = 0x10000, scoped, tag = 'input window, operand 0']
    #allocation3 [shape = 's32[2]{0}', space=sflag, size = 0x8, scoped, tag = 'scoped memory for tpu_custom_call.1']
    #allocation4 [shape = 'u8[32768]{0}', space=vmem, size = 0x8000, scoped, tag = 'input window, operand 1, single buffered']
    #allocation5 [shape = 's32[1]{0}', space=sflag, size = 0x4, scoped, tag = 'scoped memory for tpu_custom_call.1']
    #allocation6 [shape = 'u8[393216]{0}', space=vmem, size = 0x60000, scoped, tag = 'output window, operand 0']
    %8 = vsyncpa [#allocation3], 0
    %s9 = scalar_lea.sflag [#allocation3], 1
    %10 = vsyncpa %s9, 0
    %11 = vsyncpa [#allocation5], 0
    loop: start=0, step=1, limit=4
    $region2: #{tpu_custom_call.1} parent=1 // loop_pre_header
      _
    $region3: #{tpu_custom_call.1} parent=1 // loop_header
      %s13 = sphi 0, %s17
      %p14 = scmp.ge.s32.totalorder %s13, 4
      %s20 = sphi 0, %s32
      %s21 = sphi 0, %s28
      %s22 = sphi 0, %s20
      %s23 = sphi 0, %s21
      %s24 = sphi 0, %s22
      %s25 = sphi 0, %s23
      %s37 = sphi 0, %s39
      %s40 = sphi 0, %s37
      %s41 = sphi 0, %s40
      %s57 = sphi 0, %s41
      %s61 = sphi 0, %s61
      %s63 = sphi 0, %s61
      %s64 = sphi 0, %s63
      %s78 = sphi 0, %s64
      %s82 = sphi 0, %s82
      %s84 = sphi 0, %s82
      %s85 = sphi 0, %s84
      %s99 = sphi 0, %s85
      %s107 = sphi 0, %s109
      %s110 = sphi 0, %s107
      %s111 = sphi 0, %s110
      %s127 = sphi 0, %s111
    $region4: #{tpu_custom_call.1} parent=1 // loop_header_branch
      %16 = sbr.rel (%p14) target = $region8
    $region5: #{tpu_custom_call.1} parent=1 // loop_body
      %s18 = ssub.s32 %s13, 1
      %s19 = ssub.s32 %s13, 2
      %s26 = sadd.s32 1, %s21
      %p27 = scmp.ge.s32.totalorder %s26, 1
      %s28 = scalar_select %p27, 0, %s26
      %s29 = sadd.s32 1, %s20
      %s30 = scalar_select %p27, %s29, %s20
      %p31 = scmp.ge.s32.totalorder %s30, 2
      %s32 = scalar_select %p31, 0, %s30
      %s33 = ssub.s32 %s20, %s32
      %s34 = ssub.s32 %s21, %s28
      %s35 = sor.u32 %s33, %s34
      %p36 = scmp.eq.s32.totalorder %s35, 0
      %s38 = sadd.s32 %s37, 1
      %s39 = scalar_select %p36, %s37, %s38
      %p42 = pneg %p36
      %p43 = scmp.eq.s32.totalorder %s13, 1
      %p44 = por %p42, %p43
      %p45 = scmp.ne.s32.totalorder %s37, %s40
      %p46 = scmp.eq.s32.totalorder %s13, 0
      %p47 = por %p45, %p46
      %p48 = scmp.ne.s32.totalorder %s37, %s40
      %p49 = scmp.eq.s32.totalorder %s18, 1
      %p50 = por %p48, %p49
      %p51 = scmp.ne.s32.totalorder %s40, %s41
      %p52 = scmp.eq.s32.totalorder %s18, 0
      %p53 = por %p51, %p52
      %p54 = scmp.ne.s32.totalorder %s40, %s41
      %p55 = scmp.eq.s32.totalorder %s19, 1
      %p56 = por %p54, %p55
      %p58 = scmp.ne.s32.totalorder %s41, %s57
      %p59 = scmp.eq.s32.totalorder %s19, 0
      %p60 = por %p58, %p59
      %s62 = sadd.s32 %s61, 1
      %p65 = scmp.eq.s32.totalorder %s13, 1
      %p66 = scmp.ne.s32.totalorder %s61, %s63
      %p67 = scmp.eq.s32.totalorder %s13, 0
      %p68 = por %p66, %p67
      %p69 = scmp.ne.s32.totalorder %s61, %s63
      %p70 = scmp.eq.s32.totalorder %s18, 1
      %p71 = por %p69, %p70
      %p72 = scmp.ne.s32.totalorder %s63, %s64
      %p73 = scmp.eq.s32.totalorder %s18, 0
      %p74 = por %p72, %p73
      %p75 = scmp.ne.s32.totalorder %s63, %s64
      %p76 = scmp.eq.s32.totalorder %s19, 1
      %p77 = por %p75, %p76
      %p79 = scmp.ne.s32.totalorder %s64, %s78
      %p80 = scmp.eq.s32.totalorder %s19, 0
      %p81 = por %p79, %p80
      %s83 = sadd.s32 %s82, 1
      %p86 = scmp.eq.s32.totalorder %s13, 1
      %p87 = scmp.ne.s32.totalorder %s82, %s84
      %p88 = scmp.eq.s32.totalorder %s13, 0
      %p89 = por %p87, %p88
      %p90 = scmp.ne.s32.totalorder %s82, %s84
      %p91 = scmp.eq.s32.totalorder %s18, 1
      %p92 = por %p90, %p91
      %p93 = scmp.ne.s32.totalorder %s84, %s85
      %p94 = scmp.eq.s32.totalorder %s18, 0
      %p95 = por %p93, %p94
      %p96 = scmp.ne.s32.totalorder %s84, %s85
      %p97 = scmp.eq.s32.totalorder %s19, 1
      %p98 = por %p96, %p97
      %p100 = scmp.ne.s32.totalorder %s85, %s99
      %p101 = scmp.eq.s32.totalorder %s19, 0
      %p102 = por %p100, %p101
      %s103 = ssub.s32 %s20, %s32
      %s104 = ssub.s32 %s21, %s28
      %s105 = sor.u32 %s103, %s104
      %p106 = scmp.eq.s32.totalorder %s105, 0
      %s108 = sadd.s32 %s107, 1
      %s109 = scalar_select %p106, %s107, %s108
      %p112 = pneg %p106
      %p113 = scmp.eq.s32.totalorder %s13, 1
      %p114 = por %p112, %p113
      %p115 = scmp.ne.s32.totalorder %s107, %s110
      %p116 = scmp.eq.s32.totalorder %s13, 0
      %p117 = por %p115, %p116
      %p118 = scmp.ne.s32.totalorder %s107, %s110
      %p119 = scmp.eq.s32.totalorder %s18, 1
      %p120 = por %p118, %p119
      %p121 = scmp.ne.s32.totalorder %s110, %s111
      %p122 = scmp.eq.s32.totalorder %s18, 0
      %p123 = por %p121, %p122
      %p124 = scmp.ne.s32.totalorder %s110, %s111
      %p125 = scmp.eq.s32.totalorder %s19, 1
      %p126 = por %p124, %p125
      %p128 = scmp.ne.s32.totalorder %s111, %s127
      %p129 = scmp.eq.s32.totalorder %s19, 0
      %p130 = por %p128, %p129
      %p131 = scmp.le.s32.totalorder 1, %s13
      %p132 = scmp.lt.s32.totalorder %s13, 3
      %p133 = pnand %p131, %p132
      %p134 = pneg %p133
      // Predicated region
      $region9: #{tpu_custom_call.1} parent=5 // pred_check
        _
      $region10: #{tpu_custom_call.1} parent=5 // pred_check_branch
        %136 = sbr.rel (%p133) target = $region12
      $region11: #{tpu_custom_call.1} parent=5 // pred_region
        %s137 = ssub.s32 %s13, 1
        // Predicated region
        $region13: #{tpu_custom_call.1} parent=11 // pred_check
          %p138 = pneg %p74
        $region14: #{tpu_custom_call.1} parent=11 // pred_check_branch
          %140 = sbr.rel (%p138) target = $region16
        $region15: #{tpu_custom_call.1} parent=11 // pred_region
          %s142 = ssub.s32 1024, 1024
          %143 = vsyncadd [#allocation5], %s142
          %s144 = sshll.u32 [#allocation4], 4
          %s145 = int_to_ptr.vmem [resolvable:$true] %s144
          %150 = dma.hbm_to_vmem [thread:$0]  %s1, 1024, %s145, [#allocation5], 128, 128, 8
        $region16: #{tpu_custom_call.1} parent=11 // pred_fallthru
          _
        // Predicated region
        $region17: #{tpu_custom_call.1} parent=11 // pred_check
          %p151 = pneg %p95
        $region18: #{tpu_custom_call.1} parent=11 // pred_check_branch
          %153 = sbr.rel (%p151) target = $region20
        $region19: #{tpu_custom_call.1} parent=11 // pred_region
          _
        $region20: #{tpu_custom_call.1} parent=11 // pred_fallthru
          _
      $region12: #{tpu_custom_call.1} parent=5 // pred_fallthru
        _
      %p154 = scmp.lt.s32.totalorder %s13, 2
      // Predicated region
      $region21: #{tpu_custom_call.1} parent=5 // pred_check
        %p155 = pneg %p154
      $region22: #{tpu_custom_call.1} parent=5 // pred_check_branch
        %157 = sbr.rel (%p155) target = $region24
      $region23: #{tpu_custom_call.1} parent=5 // pred_region
        // Predicated region
        $region25: #{tpu_custom_call.1} parent=23 // pred_check
          %p158 = pneg %p47
        $region26: #{tpu_custom_call.1} parent=23 // pred_check_branch
          %160 = sbr.rel (%p158) target = $region28
        $region27: #{tpu_custom_call.1} parent=23 // pred_region
          %s161 = sand.u32 %s37, 1
          %s162 = scalar_lea.sflag [#allocation3], %s161
          %s163 = sand.u32 %s37, 1
          %s164 = smul.addr %s163, 64
          %s165 = scalar_lea.vmem [#allocation2], %s164
          %s166 = smul.u32 8, %s21
          %s168 = ssub.s32 1024, 1024
          %169 = vsyncadd %s162, %s168
          %s170 = smul.addr %s20, 8
          %s171 = sadd.s32 %s166, %s170
          %s172 = smul.addr %s171, 128
          %s173 = scalar_lea.hbm %s0, %s172
          %s174 = sshll.u32 %s165, 4
          %s175 = int_to_ptr.vmem [resolvable:$true] %s174
          %180 = dma.hbm_to_vmem [thread:$0]  %s173, 1024, %s175, %s162, 128, 128, 8
        $region28: #{tpu_custom_call.1} parent=23 // pred_fallthru
          _
      $region24: #{tpu_custom_call.1} parent=5 // pred_fallthru
        _
      %p181 = scmp.le.s32.totalorder 1, %s13
      %p182 = scmp.lt.s32.totalorder %s13, 3
      %p183 = pnand %p181, %p182
      %p184 = pneg %p183
      // Predicated region
      $region29: #{tpu_custom_call.1} parent=5 // pred_check
        _
      $region30: #{tpu_custom_call.1} parent=5 // pred_check_branch
        %186 = sbr.rel (%p183) target = $region32
      $region31: #{tpu_custom_call.1} parent=5 // pred_region
        %s187 = ssub.s32 %s13, 1
        %s188 = sand.u32 %s40, 1
        %s189 = scalar_lea.sflag [#allocation3], %s188
        %s190 = sand.u32 %s40, 1
        %s191 = smul.addr %s190, 64
        %s192 = scalar_lea.vmem [#allocation2], %s191
        // Predicated region
        $region33: #{tpu_custom_call.1} parent=31 // pred_check
          %p193 = pneg %p53
        $region34: #{tpu_custom_call.1} parent=31 // pred_check_branch
          %195 = sbr.rel (%p193) target = $region36
        $region35: #{tpu_custom_call.1} parent=31 // pred_region
          %196 = dma.done %s189, 1024
        $region36: #{tpu_custom_call.1} parent=31 // pred_fallthru
          _
        // Predicated region
        $region37: #{tpu_custom_call.1} parent=31 // pred_check
          %p197 = pneg %p74
        $region38: #{tpu_custom_call.1} parent=31 // pred_check_branch
          %199 = sbr.rel (%p197) target = $region40
        $region39: #{tpu_custom_call.1} parent=31 // pred_region
          %200 = dma.done [#allocation5], 1024
        $region40: #{tpu_custom_call.1} parent=31 // pred_fallthru
          _
        %s201 = sand.u32 %s40, 1
        %s202 = scalar_lea.sflag [#allocation3], %s201
        %s203 = sand.u32 %s40, 1
        %s204 = smul.addr %s203, 64
        %s205 = scalar_lea.vmem [#allocation2], %s204
        %p206 = pneg %p53
        %p207 = pneg %p50
        %p208 = pneg %p74
        %p209 = pneg %p71
        %p210 = pneg %p95
        %p211 = pneg %p92
        %p212 = pneg %p123
        %p213 = pneg %p120
        %s214 = sand.u32 %s110, 1
        %s215 = sand.u32 %s110, 1
        %s216 = smul.addr %s215, 384
        %s217 = scalar_lea.vmem [#allocation6], %s216
        %s218 = smul.u32 8, %s23
        %s219 = smul.u32 4, %s22
        %s220 = smul.u32 8, %s23
        %v222 = vld [vmem:[%s192] sm:$0xff]
        %v223 = vld [vmem:[%s192 + $0x8] sm:$0xff]
        %v224 = vld [vmem:[%s192 + $0x10] sm:$0xff]
        %v225 = vld [vmem:[%s192 + $0x18] sm:$0xff]
        %v226 = vld [vmem:[%s192 + $0x20] sm:$0xff]
        %v227 = vld [vmem:[%s192 + $0x28] sm:$0xff]
        %v228 = vld [vmem:[%s192 + $0x30] sm:$0xff]
        %v229 = vld [vmem:[%s192 + $0x38] sm:$0xff]
        %v230 = vpack.c.bf16 %v223, %v222
        %v231 = vpack.c.bf16 %v225, %v224
        %v232 = vpack.c.bf16 %v227, %v226
        %v233 = vpack.c.bf16 %v229, %v228
        %v234 = vld [vmem:[#allocation4] sm:$0xf]
        %v235 = vld [vmem:[#allocation4 + $0x8] sm:$0xf]
        %v236 = vld [vmem:[#allocation4 + $0x10] sm:$0xf]
        %v237 = vld [vmem:[#allocation4 + $0x18] sm:$0xf]
        %v238 = vld [vmem:[#allocation4 + $0x20] sm:$0xf]
        %v239 = vld [vmem:[#allocation4 + $0x28] sm:$0xf]
        %v240 = vld [vmem:[#allocation4 + $0x30] sm:$0xf]
        %v241 = vld [vmem:[#allocation4 + $0x38] sm:$0xf]
        %v242 = vld [vmem:[%s2] sm:$0x1]
        %v244 = vlaneseq
        %v245 = vshrl.u32 %v244, 7
        %v246 = vsub.s32 0, %v245
        %v247 = vrot.slane %v242, %v246
        %v257 = vunpack.c.l.b16 %v234
        %v258 = vunpack.c.l.b16 %v235
        %v259 = vunpack.c.l.b16 %v236
        %v260 = vunpack.c.l.b16 %v237
        %v261 = vunpack.c.l.b16 %v238
        %v262 = vunpack.c.l.b16 %v239
        %v263 = vunpack.c.l.b16 %v240
        %v264 = vunpack.c.l.b16 %v241
        %v265 = vpack.c.b16 %v258, %v257
        %v266 = vpack.c.b16 %v260, %v259
        %v267 = vpack.c.b16 %v262, %v261
        %v268 = vpack.c.b16 %v264, %v263
        %vm273 = vcmask 523264
        %v275 = vsel %vm273, %v230, 0
        %v278 = vsel %vm273, %v231, 0
        %v281 = vsel %vm273, %v232, 0
        %v284 = vsel %vm273, %v233, 0
        %286 = vmatprep.subr.bf16.mxu0 0
        %287 = vmatpush1.bf16.msra.mxu0 %v265
        %288 = vmatprep.subr.bf16.mxu0 0
        %289 = vmatpush1.bf16.msra.mxu0 %v266
        %290 = vmatprep.subr.bf16.mxu0 0
        %291 = vmatpush1.bf16.msra.mxu0 %v267
        %292 = vmatprep.subr.bf16.mxu0 0
        %293 = vmatpush1.bf16.msra.mxu0 %v268
        %294 = vmatprep.subr.bf16.mxu0 0
        %295 = vmatpush1.bf16.msra.mxu0 0
        %296 = vmatprep.subr.bf16.mxu0 0
        %297 = vmatpush1.bf16.msra.mxu0 0
        %298 = vmatprep.subr.bf16.mxu0 0
        %299 = vmatpush1.bf16.msra.mxu0 0
        %300 = vmatprep.subr.bf16.mxu0 0
        %301 = vmatpush1.bf16.msra.mxu0 0
        %302 = vmatprep.subr.bf16.mxu0 0
        %303 = vmatpush1.bf16.msra.mxu0 0
        %304 = vmatprep.subr.bf16.mxu0 0
        %305 = vmatpush1.bf16.msra.mxu0 0
        %306 = vmatprep.subr.bf16.mxu0 0
        %307 = vmatpush1.bf16.msra.mxu0 0
        %308 = vmatprep.subr.bf16.mxu0 0
        %309 = vmatpush1.bf16.msra.mxu0 0
        %310 = vmatprep.subr.bf16.mxu0 0
        %311 = vmatpush1.bf16.msra.mxu0 0
        %312 = vmatprep.subr.bf16.mxu0 0
        %313 = vmatpush1.bf16.msra.mxu0 0
        %314 = vmatprep.subr.bf16.mxu0 0
        %315 = vmatpush1.bf16.msra.mxu0 0
        %316 = vmatprep.subr.bf16.mxu0 0
        %317 = vmatpush1.bf16.msra.mxu0 0
        %318 = vmatprep.mubr.bf16.mxu0 0
        %319 = vmatmul.mubr.bf16.gmra.mrb[0].mxu0 %v275
        %v320 = vpop.f32.mrb[0].mxu0
        %v321 = vadd.f32 %v247, %v320
        %v322 = vpop.f32.mrb[0].mxu0
        %v323 = vpop.f32.mrb[0].mxu0
        %v324 = vadd.f32 %v247, %v323
        %v325 = vpop.f32.mrb[0].mxu0
        %326 = vmatprep.mubr.bf16.mxu0 0
        %327 = vmatmul.mubr.bf16.gmra.mrb[0].mxu0 %v278
        %v328 = vpop.f32.mrb[0].mxu0
        %v329 = vadd.f32 %v247, %v328
        %v330 = vpop.f32.mrb[0].mxu0
        %v331 = vpop.f32.mrb[0].mxu0
        %v332 = vadd.f32 %v247, %v331
        %v333 = vpop.f32.mrb[0].mxu0
        %334 = vmatprep.mubr.bf16.mxu0 0
        %335 = vmatmul.mubr.bf16.gmra.mrb[0].mxu0 %v281
        %v336 = vpop.f32.mrb[0].mxu0
        %v337 = vadd.f32 %v247, %v336
        %v338 = vpop.f32.mrb[0].mxu0
        %v339 = vpop.f32.mrb[0].mxu0
        %v340 = vadd.f32 %v247, %v339
        %v341 = vpop.f32.mrb[0].mxu0
        %342 = vmatprep.mubr.bf16.mxu0 0
        %343 = vmatmul.mubr.bf16.gmra.mrb[0].mxu0 %v284
        %v344 = vpop.f32.mrb[0].mxu0
        %v345 = vadd.f32 %v247, %v344
        %v346 = vpop.f32.mrb[0].mxu0
        %v347 = vpop.f32.mrb[0].mxu0
        %v348 = vadd.f32 %v247, %v347
        %v349 = vpop.f32.mrb[0].mxu0
        %350 = vdwg.mxu0
        %v351 = vpack.c.bf16 %v324, %v321
        %v352 = vpack.c.bf16 %v332, %v329
        %v353 = vpack.c.bf16 %v340, %v337
        %v354 = vpack.c.bf16 %v348, %v345
        %v359 = vunpack.c.l.b16 %v351
        %v360 = vunpack.c.h.b16 %v351
        %v361 = vunpack.c.l.b16 %v352
        %v362 = vunpack.c.h.b16 %v352
        %v363 = vunpack.c.l.b16 %v353
        %v364 = vunpack.c.h.b16 %v353
        %v365 = vunpack.c.l.b16 %v354
        %v366 = vunpack.c.h.b16 %v354
        %v367 = vpack.c.b16 %v359, %v359
        %v368 = vpack.c.b16 %v360, %v360
        %v369 = vpack.c.b16 %v361, %v361
        %v370 = vpack.c.b16 %v362, %v362
        %v371 = vpack.c.b16 %v363, %v363
        %v372 = vpack.c.b16 %v364, %v364
        %v373 = vpack.c.b16 %v365, %v365
        %v374 = vpack.c.b16 %v366, %v366
        %vm383 = vcmask 125952
        %384 = vst.msk [vmem:[%s217] sm:$0xf] %vm383, %v367
        %385 = vst.msk [vmem:[%s217 + $0x4] sm:$0xf] %vm383, %v368
        %386 = vst.msk [vmem:[%s217 + $0x8] sm:$0xf] %vm383, %v369
        %387 = vst.msk [vmem:[%s217 + $0xc] sm:$0xf] %vm383, %v370
        %388 = vst.msk [vmem:[%s217 + $0x10] sm:$0xf] %vm383, %v371
        %389 = vst.msk [vmem:[%s217 + $0x14] sm:$0xf] %vm383, %v372
        %390 = vst.msk [vmem:[%s217 + $0x18] sm:$0xf] %vm383, %v373
        %391 = vst.msk [vmem:[%s217 + $0x1c] sm:$0xf] %vm383, %v374
        %392 = vrot.lane.b32.xlu0 %v367, 112
        %v393 = vpop.permute.xlu0 %392
        %394 = vrot.lane.b32.xlu0 %v368, 112
        %v395 = vpop.permute.xlu0 %394
        %396 = vrot.lane.b32.xlu0 %v369, 112
        %v397 = vpop.permute.xlu0 %396
        %398 = vrot.lane.b32.xlu0 %v370, 112
        %v399 = vpop.permute.xlu0 %398
        %400 = vrot.lane.b32.xlu0 %v371, 112
        %v401 = vpop.permute.xlu0 %400
        %402 = vrot.lane.b32.xlu0 %v372, 112
        %v403 = vpop.permute.xlu0 %402
        %404 = vrot.lane.b32.xlu0 %v373, 112
        %v405 = vpop.permute.xlu0 %404
        %406 = vrot.lane.b32.xlu0 %v374, 112
        %v407 = vpop.permute.xlu0 %406
        %s416 = scalar_lea.vmem %s217, 32 [#allocation6]
        %417 = vst.msk [vmem:[%s416] sm:$0xf] %vm383, %v393
        %418 = vst.msk [vmem:[%s416 + $0x4] sm:$0xf] %vm383, %v395
        %419 = vst.msk [vmem:[%s416 + $0x8] sm:$0xf] %vm383, %v397
        %420 = vst.msk [vmem:[%s416 + $0xc] sm:$0xf] %vm383, %v399
        %421 = vst.msk [vmem:[%s416 + $0x10] sm:$0xf] %vm383, %v401
        %422 = vst.msk [vmem:[%s416 + $0x14] sm:$0xf] %vm383, %v403
        %423 = vst.msk [vmem:[%s416 + $0x18] sm:$0xf] %vm383, %v405
        %424 = vst.msk [vmem:[%s416 + $0x1c] sm:$0xf] %vm383, %v407
        %425 = vrot.lane.b32.xlu0 %v367, 96
        %v426 = vpop.permute.xlu0 %425
        %427 = vrot.lane.b32.xlu0 %v368, 96
        %v428 = vpop.permute.xlu0 %427
        %429 = vrot.lane.b32.xlu0 %v369, 96
        %v430 = vpop.permute.xlu0 %429
        %431 = vrot.lane.b32.xlu0 %v370, 96
        %v432 = vpop.permute.xlu0 %431
        %433 = vrot.lane.b32.xlu0 %v371, 96
        %v434 = vpop.permute.xlu0 %433
        %435 = vrot.lane.b32.xlu0 %v372, 96
        %v436 = vpop.permute.xlu0 %435
        %437 = vrot.lane.b32.xlu0 %v373, 96
        %v438 = vpop.permute.xlu0 %437
        %439 = vrot.lane.b32.xlu0 %v374, 96
        %v440 = vpop.permute.xlu0 %439
        %s449 = scalar_lea.vmem %s217, 64 [#allocation6]
        %450 = vst.msk [vmem:[%s449] sm:$0xf] %vm383, %v426
        %451 = vst.msk [vmem:[%s449 + $0x4] sm:$0xf] %vm383, %v428
        %452 = vst.msk [vmem:[%s449 + $0x8] sm:$0xf] %vm383, %v430
        %453 = vst.msk [vmem:[%s449 + $0xc] sm:$0xf] %vm383, %v432
        %454 = vst.msk [vmem:[%s449 + $0x10] sm:$0xf] %vm383, %v434
        %455 = vst.msk [vmem:[%s449 + $0x14] sm:$0xf] %vm383, %v436
        %456 = vst.msk [vmem:[%s449 + $0x18] sm:$0xf] %vm383, %v438
        %457 = vst.msk [vmem:[%s449 + $0x1c] sm:$0xf] %vm383, %v440
        %458 = vrot.lane.b32.xlu0 %v367, 80
        %v459 = vpop.permute.xlu0 %458
        %460 = vrot.lane.b32.xlu0 %v368, 80
        %v461 = vpop.permute.xlu0 %460
        %462 = vrot.lane.b32.xlu0 %v369, 80
        %v463 = vpop.permute.xlu0 %462
        %464 = vrot.lane.b32.xlu0 %v370, 80
        %v465 = vpop.permute.xlu0 %464
        %466 = vrot.lane.b32.xlu0 %v371, 80
        %v467 = vpop.permute.xlu0 %466
        %468 = vrot.lane.b32.xlu0 %v372, 80
        %v469 = vpop.permute.xlu0 %468
        %470 = vrot.lane.b32.xlu0 %v373, 80
        %v471 = vpop.permute.xlu0 %470
        %472 = vrot.lane.b32.xlu0 %v374, 80
        %v473 = vpop.permute.xlu0 %472
        %s482 = scalar_lea.vmem %s217, 96 [#allocation6]
        %483 = vst.msk [vmem:[%s482] sm:$0xf] %vm383, %v459
        %484 = vst.msk [vmem:[%s482 + $0x4] sm:$0xf] %vm383, %v461
        %485 = vst.msk [vmem:[%s482 + $0x8] sm:$0xf] %vm383, %v463
        %486 = vst.msk [vmem:[%s482 + $0xc] sm:$0xf] %vm383, %v465
        %487 = vst.msk [vmem:[%s482 + $0x10] sm:$0xf] %vm383, %v467
        %488 = vst.msk [vmem:[%s482 + $0x14] sm:$0xf] %vm383, %v469
        %489 = vst.msk [vmem:[%s482 + $0x18] sm:$0xf] %vm383, %v471
        %490 = vst.msk [vmem:[%s482 + $0x1c] sm:$0xf] %vm383, %v473
        %v491 = vld [vmem:[#allocation4] sm:$0xf]
        %v492 = vld [vmem:[#allocation4 + $0x8] sm:$0xf]
        %v493 = vld [vmem:[#allocation4 + $0x10] sm:$0xf]
        %v494 = vld [vmem:[#allocation4 + $0x18] sm:$0xf]
        %v495 = vld [vmem:[#allocation4 + $0x20] sm:$0xf]
        %v496 = vld [vmem:[#allocation4 + $0x28] sm:$0xf]
        %v497 = vld [vmem:[#allocation4 + $0x30] sm:$0xf]
        %v498 = vld [vmem:[#allocation4 + $0x38] sm:$0xf]
        %v499 = vld [vmem:[%s2] sm:$0x1]
        %v501 = vlaneseq
        %v502 = vshrl.u32 %v501, 7
        %v503 = vsub.s32 0, %v502
        %v504 = vrot.slane %v499, %v503
        %v513 = vunpack.c.l.b16 %v491
        %v514 = vunpack.c.l.b16 %v492
        %v515 = vunpack.c.l.b16 %v493
        %v516 = vunpack.c.l.b16 %v494
        %v517 = vunpack.c.l.b16 %v495
        %v518 = vunpack.c.l.b16 %v496
        %v519 = vunpack.c.l.b16 %v497
        %v520 = vunpack.c.l.b16 %v498
        %v521 = vpack.c.b16 %v514, %v513
        %v522 = vpack.c.b16 %v516, %v515
        %v523 = vpack.c.b16 %v518, %v517
        %v524 = vpack.c.b16 %v520, %v519
        %525 = vrot.lane.b32.xlu0 %v521, 64
        %v526 = vpop.permute.xlu0 %525
        %527 = vrot.lane.b32.xlu0 %v522, 64
        %v528 = vpop.permute.xlu0 %527
        %529 = vrot.lane.b32.xlu0 %v523, 64
        %v530 = vpop.permute.xlu0 %529
        %531 = vrot.lane.b32.xlu0 %v524, 64
        %v532 = vpop.permute.xlu0 %531
        %537 = vrot.lane.b32.xlu0 %v504, 64
        %v538 = vpop.permute.xlu0 %537
        %540 = vmatprep.subr.bf16.mxu0 0
        %541 = vmatpush1.bf16.msra.mxu0 %v526
        %542 = vmatprep.subr.bf16.mxu0 0
        %543 = vmatpush1.bf16.msra.mxu0 %v528
        %544 = vmatprep.subr.bf16.mxu0 0
        %545 = vmatpush1.bf16.msra.mxu0 %v530
        %546 = vmatprep.subr.bf16.mxu0 0
        %547 = vmatpush1.bf16.msra.mxu0 %v532
        %548 = vmatprep.subr.bf16.mxu0 0
        %549 = vmatpush1.bf16.msra.mxu0 0
        %550 = vmatprep.subr.bf16.mxu0 0
        %551 = vmatpush1.bf16.msra.mxu0 0
        %552 = vmatprep.subr.bf16.mxu0 0
        %553 = vmatpush1.bf16.msra.mxu0 0
        %554 = vmatprep.subr.bf16.mxu0 0
        %555 = vmatpush1.bf16.msra.mxu0 0
        %556 = vmatprep.subr.bf16.mxu0 0
        %557 = vmatpush1.bf16.msra.mxu0 0
        %558 = vmatprep.subr.bf16.mxu0 0
        %559 = vmatpush1.bf16.msra.mxu0 0
        %560 = vmatprep.subr.bf16.mxu0 0
        %561 = vmatpush1.bf16.msra.mxu0 0
        %562 = vmatprep.subr.bf16.mxu0 0
        %563 = vmatpush1.bf16.msra.mxu0 0
        %564 = vmatprep.subr.bf16.mxu0 0
        %565 = vmatpush1.bf16.msra.mxu0 0
        %566 = vmatprep.subr.bf16.mxu0 0
        %567 = vmatpush1.bf16.msra.mxu0 0
        %568 = vmatprep.subr.bf16.mxu0 0
        %569 = vmatpush1.bf16.msra.mxu0 0
        %570 = vmatprep.subr.bf16.mxu0 0
        %571 = vmatpush1.bf16.msra.mxu0 0
        %572 = vmatprep.mubr.bf16.mxu0 0
        %573 = vmatmul.mubr.bf16.gmra.mrb[0].mxu0 %v275
        %v574 = vpop.f32.mrb[0].mxu0
        %v575 = vadd.f32 %v538, %v574
        %v576 = vpop.f32.mrb[0].mxu0
        %v577 = vpop.f32.mrb[0].mxu0
        %v578 = vadd.f32 %v538, %v577
        %v579 = vpop.f32.mrb[0].mxu0
        %580 = vmatprep.mubr.bf16.mxu0 0
        %581 = vmatmul.mubr.bf16.gmra.mrb[0].mxu0 %v278
        %v582 = vpop.f32.mrb[0].mxu0
        %v583 = vadd.f32 %v538, %v582
        %v584 = vpop.f32.mrb[0].mxu0
        %v585 = vpop.f32.mrb[0].mxu0
        %v586 = vadd.f32 %v538, %v585
        %v587 = vpop.f32.mrb[0].mxu0
        %588 = vmatprep.mubr.bf16.mxu0 0
        %589 = vmatmul.mubr.bf16.gmra.mrb[0].mxu0 %v281
        %v590 = vpop.f32.mrb[0].mxu0
        %v591 = vadd.f32 %v538, %v590
        %v592 = vpop.f32.mrb[0].mxu0
        %v593 = vpop.f32.mrb[0].mxu0
        %v594 = vadd.f32 %v538, %v593
        %v595 = vpop.f32.mrb[0].mxu0
        %596 = vmatprep.mubr.bf16.mxu0 0
        %597 = vmatmul.mubr.bf16.gmra.mrb[0].mxu0 %v284
        %v598 = vpop.f32.mrb[0].mxu0
        %v599 = vadd.f32 %v538, %v598
        %v600 = vpop.f32.mrb[0].mxu0
        %v601 = vpop.f32.mrb[0].mxu0
        %v602 = vadd.f32 %v538, %v601
        %v603 = vpop.f32.mrb[0].mxu0
        %604 = vdwg.mxu0
        %v605 = vpack.c.bf16 %v578, %v575
        %v606 = vpack.c.bf16 %v586, %v583
        %v607 = vpack.c.bf16 %v594, %v591
        %v608 = vpack.c.bf16 %v602, %v599
        %v613 = vunpack.c.l.b16 %v605
        %v614 = vunpack.c.h.b16 %v605
        %v615 = vunpack.c.l.b16 %v606
        %v616 = vunpack.c.h.b16 %v606
        %v617 = vunpack.c.l.b16 %v607
        %v618 = vunpack.c.h.b16 %v607
        %v619 = vunpack.c.l.b16 %v608
        %v620 = vunpack.c.h.b16 %v608
        %v621 = vpack.c.b16 %v613, %v613
        %v622 = vpack.c.b16 %v614, %v614
        %v623 = vpack.c.b16 %v615, %v615
        %v624 = vpack.c.b16 %v616, %v616
        %v625 = vpack.c.b16 %v617, %v617
        %v626 = vpack.c.b16 %v618, %v618
        %v627 = vpack.c.b16 %v619, %v619
        %v628 = vpack.c.b16 %v620, %v620
        %s637 = scalar_lea.vmem %s217, 128 [#allocation6]
        %638 = vst.msk [vmem:[%s637] sm:$0xf] %vm383, %v621
        %639 = vst.msk [vmem:[%s637 + $0x4] sm:$0xf] %vm383, %v622
        %640 = vst.msk [vmem:[%s637 + $0x8] sm:$0xf] %vm383, %v623
        %641 = vst.msk [vmem:[%s637 + $0xc] sm:$0xf] %vm383, %v624
        %642 = vst.msk [vmem:[%s637 + $0x10] sm:$0xf] %vm383, %v625
        %643 = vst.msk [vmem:[%s637 + $0x14] sm:$0xf] %vm383, %v626
        %644 = vst.msk [vmem:[%s637 + $0x18] sm:$0xf] %vm383, %v627
        %645 = vst.msk [vmem:[%s637 + $0x1c] sm:$0xf] %vm383, %v628
        %646 = vrot.lane.b32.xlu0 %v621, 112
        %v647 = vpop.permute.xlu0 %646
        %648 = vrot.lane.b32.xlu0 %v622, 112
        %v649 = vpop.permute.xlu0 %648
        %650 = vrot.lane.b32.xlu0 %v623, 112
        %v651 = vpop.permute.xlu0 %650
        %652 = vrot.lane.b32.xlu0 %v624, 112
        %v653 = vpop.permute.xlu0 %652
        %654 = vrot.lane.b32.xlu0 %v625, 112
        %v655 = vpop.permute.xlu0 %654
        %656 = vrot.lane.b32.xlu0 %v626, 112
        %v657 = vpop.permute.xlu0 %656
        %658 = vrot.lane.b32.xlu0 %v627, 112
        %v659 = vpop.permute.xlu0 %658
        %660 = vrot.lane.b32.xlu0 %v628, 112
        %v661 = vpop.permute.xlu0 %660
        %s670 = scalar_lea.vmem %s217, 160 [#allocation6]
        %671 = vst.msk [vmem:[%s670] sm:$0xf] %vm383, %v647
        %672 = vst.msk [vmem:[%s670 + $0x4] sm:$0xf] %vm383, %v649
        %673 = vst.msk [vmem:[%s670 + $0x8] sm:$0xf] %vm383, %v651
        %674 = vst.msk [vmem:[%s670 + $0xc] sm:$0xf] %vm383, %v653
        %675 = vst.msk [vmem:[%s670 + $0x10] sm:$0xf] %vm383, %v655
        %676 = vst.msk [vmem:[%s670 + $0x14] sm:$0xf] %vm383, %v657
        %677 = vst.msk [vmem:[%s670 + $0x18] sm:$0xf] %vm383, %v659
        %678 = vst.msk [vmem:[%s670 + $0x1c] sm:$0xf] %vm383, %v661
        %679 = vrot.lane.b32.xlu0 %v621, 96
        %v680 = vpop.permute.xlu0 %679
        %681 = vrot.lane.b32.xlu0 %v622, 96
        %v682 = vpop.permute.xlu0 %681
        %683 = vrot.lane.b32.xlu0 %v623, 96
        %v684 = vpop.permute.xlu0 %683
        %685 = vrot.lane.b32.xlu0 %v624, 96
        %v686 = vpop.permute.xlu0 %685
        %687 = vrot.lane.b32.xlu0 %v625, 96
        %v688 = vpop.permute.xlu0 %687
        %689 = vrot.lane.b32.xlu0 %v626, 96
        %v690 = vpop.permute.xlu0 %689
        %691 = vrot.lane.b32.xlu0 %v627, 96
        %v692 = vpop.permute.xlu0 %691
        %693 = vrot.lane.b32.xlu0 %v628, 96
        %v694 = vpop.permute.xlu0 %693
        %s703 = scalar_lea.vmem %s217, 192 [#allocation6]
        %704 = vst.msk [vmem:[%s703] sm:$0xf] %vm383, %v680
        %705 = vst.msk [vmem:[%s703 + $0x4] sm:$0xf] %vm383, %v682
        %706 = vst.msk [vmem:[%s703 + $0x8] sm:$0xf] %vm383, %v684
        %707 = vst.msk [vmem:[%s703 + $0xc] sm:$0xf] %vm383, %v686
        %708 = vst.msk [vmem:[%s703 + $0x10] sm:$0xf] %vm383, %v688
        %709 = vst.msk [vmem:[%s703 + $0x14] sm:$0xf] %vm383, %v690
        %710 = vst.msk [vmem:[%s703 + $0x18] sm:$0xf] %vm383, %v692
        %711 = vst.msk [vmem:[%s703 + $0x1c] sm:$0xf] %vm383, %v694
        %712 = vrot.lane.b32.xlu0 %v621, 80
        %v713 = vpop.permute.xlu0 %712
        %714 = vrot.lane.b32.xlu0 %v622, 80
        %v715 = vpop.permute.xlu0 %714
        %716 = vrot.lane.b32.xlu0 %v623, 80
        %v717 = vpop.permute.xlu0 %716
        %718 = vrot.lane.b32.xlu0 %v624, 80
        %v719 = vpop.permute.xlu0 %718
        %720 = vrot.lane.b32.xlu0 %v625, 80
        %v721 = vpop.permute.xlu0 %720
        %722 = vrot.lane.b32.xlu0 %v626, 80
        %v723 = vpop.permute.xlu0 %722
        %724 = vrot.lane.b32.xlu0 %v627, 80
        %v725 = vpop.permute.xlu0 %724
        %726 = vrot.lane.b32.xlu0 %v628, 80
        %v727 = vpop.permute.xlu0 %726
        %s736 = scalar_lea.vmem %s217, 224 [#allocation6]
        %737 = vst.msk [vmem:[%s736] sm:$0xf] %vm383, %v713
        %738 = vst.msk [vmem:[%s736 + $0x4] sm:$0xf] %vm383, %v715
        %739 = vst.msk [vmem:[%s736 + $0x8] sm:$0xf] %vm383, %v717
        %740 = vst.msk [vmem:[%s736 + $0xc] sm:$0xf] %vm383, %v719
        %741 = vst.msk [vmem:[%s736 + $0x10] sm:$0xf] %vm383, %v721
        %742 = vst.msk [vmem:[%s736 + $0x14] sm:$0xf] %vm383, %v723
        %743 = vst.msk [vmem:[%s736 + $0x18] sm:$0xf] %vm383, %v725
        %744 = vst.msk [vmem:[%s736 + $0x1c] sm:$0xf] %vm383, %v727
        %v745 = vld [vmem:[#allocation4 + $0x4] sm:$0xf]
        %v746 = vld [vmem:[#allocation4 + $0xc] sm:$0xf]
        %v747 = vld [vmem:[#allocation4 + $0x14] sm:$0xf]
        %v748 = vld [vmem:[#allocation4 + $0x1c] sm:$0xf]
        %v749 = vld [vmem:[#allocation4 + $0x24] sm:$0xf]
        %v750 = vld [vmem:[#allocation4 + $0x2c] sm:$0xf]
        %v751 = vld [vmem:[#allocation4 + $0x34] sm:$0xf]
        %v752 = vld [vmem:[#allocation4 + $0x3c] sm:$0xf]
        %v753 = vld [vmem:[%s2 + $0x1] sm:$0x1]
        %v755 = vlaneseq
        %v756 = vshrl.u32 %v755, 7
        %v757 = vsub.s32 0, %v756
        %v758 = vrot.slane %v753, %v757
        %v768 = vunpack.c.l.b16 %v745
        %v769 = vunpack.c.l.b16 %v746
        %v770 = vunpack.c.l.b16 %v747
        %v771 = vunpack.c.l.b16 %v748
        %v772 = vunpack.c.l.b16 %v749
        %v773 = vunpack.c.l.b16 %v750
        %v774 = vunpack.c.l.b16 %v751
        %v775 = vunpack.c.l.b16 %v752
        %v776 = vpack.c.b16 %v769, %v768
        %v777 = vpack.c.b16 %v771, %v770
        %v778 = vpack.c.b16 %v773, %v772
        %v779 = vpack.c.b16 %v775, %v774
        %784 = vmatprep.subr.bf16.mxu0 0
        %785 = vmatpush1.bf16.msra.mxu0 %v776
        %786 = vmatprep.subr.bf16.mxu0 0
        %787 = vmatpush1.bf16.msra.mxu0 %v777
        %788 = vmatprep.subr.bf16.mxu0 0
        %789 = vmatpush1.bf16.msra.mxu0 %v778
        %790 = vmatprep.subr.bf16.mxu0 0
        %791 = vmatpush1.bf16.msra.mxu0 %v779
        %792 = vmatprep.subr.bf16.mxu0 0
        %793 = vmatpush1.bf16.msra.mxu0 0
        %794 = vmatprep.subr.bf16.mxu0 0
        %795 = vmatpush1.bf16.msra.mxu0 0
        %796 = vmatprep.subr.bf16.mxu0 0
        %797 = vmatpush1.bf16.msra.mxu0 0
        %798 = vmatprep.subr.bf16.mxu0 0
        %799 = vmatpush1.bf16.msra.mxu0 0
        %800 = vmatprep.subr.bf16.mxu0 0
        %801 = vmatpush1.bf16.msra.mxu0 0
        %802 = vmatprep.subr.bf16.mxu0 0
        %803 = vmatpush1.bf16.msra.mxu0 0
        %804 = vmatprep.subr.bf16.mxu0 0
        %805 = vmatpush1.bf16.msra.mxu0 0
        %806 = vmatprep.subr.bf16.mxu0 0
        %807 = vmatpush1.bf16.msra.mxu0 0
        %808 = vmatprep.subr.bf16.mxu0 0
        %809 = vmatpush1.bf16.msra.mxu0 0
        %810 = vmatprep.subr.bf16.mxu0 0
        %811 = vmatpush1.bf16.msra.mxu0 0
        %812 = vmatprep.subr.bf16.mxu0 0
        %813 = vmatpush1.bf16.msra.mxu0 0
        %814 = vmatprep.subr.bf16.mxu0 0
        %815 = vmatpush1.bf16.msra.mxu0 0
        %816 = vmatprep.mubr.bf16.mxu0 0
        %817 = vmatmul.mubr.bf16.gmra.mrb[0].mxu0 %v275
        %v818 = vpop.f32.mrb[0].mxu0
        %v819 = vadd.f32 %v758, %v818
        %v820 = vpop.f32.mrb[0].mxu0
        %v821 = vpop.f32.mrb[0].mxu0
        %v822 = vadd.f32 %v758, %v821
        %v823 = vpop.f32.mrb[0].mxu0
        %824 = vmatprep.mubr.bf16.mxu0 0
        %825 = vmatmul.mubr.bf16.gmra.mrb[0].mxu0 %v278
        %v826 = vpop.f32.mrb[0].mxu0
        %v827 = vadd.f32 %v758, %v826
        %v828 = vpop.f32.mrb[0].mxu0
        %v829 = vpop.f32.mrb[0].mxu0
        %v830 = vadd.f32 %v758, %v829
        %v831 = vpop.f32.mrb[0].mxu0
        %832 = vmatprep.mubr.bf16.mxu0 0
        %833 = vmatmul.mubr.bf16.gmra.mrb[0].mxu0 %v281
        %v834 = vpop.f32.mrb[0].mxu0
        %v835 = vadd.f32 %v758, %v834
        %v836 = vpop.f32.mrb[0].mxu0
        %v837 = vpop.f32.mrb[0].mxu0
        %v838 = vadd.f32 %v758, %v837
        %v839 = vpop.f32.mrb[0].mxu0
        %840 = vmatprep.mubr.bf16.mxu0 0
        %841 = vmatmul.mubr.bf16.gmra.mrb[0].mxu0 %v284
        %v842 = vpop.f32.mrb[0].mxu0
        %v843 = vadd.f32 %v758, %v842
        %v844 = vpop.f32.mrb[0].mxu0
        %v845 = vpop.f32.mrb[0].mxu0
        %v846 = vadd.f32 %v758, %v845
        %v847 = vpop.f32.mrb[0].mxu0
        %848 = vdwg.mxu0
        %v849 = vpack.c.bf16 %v822, %v819
        %v850 = vpack.c.bf16 %v830, %v827
        %v851 = vpack.c.bf16 %v838, %v835
        %v852 = vpack.c.bf16 %v846, %v843
        %v857 = vunpack.c.l.b16 %v849
        %v858 = vunpack.c.h.b16 %v849
        %v859 = vunpack.c.l.b16 %v850
        %v860 = vunpack.c.h.b16 %v850
        %v861 = vunpack.c.l.b16 %v851
        %v862 = vunpack.c.h.b16 %v851
        %v863 = vunpack.c.l.b16 %v852
        %v864 = vunpack.c.h.b16 %v852
        %v865 = vpack.c.b16 %v857, %v857
        %v866 = vpack.c.b16 %v858, %v858
        %v867 = vpack.c.b16 %v859, %v859
        %v868 = vpack.c.b16 %v860, %v860
        %v869 = vpack.c.b16 %v861, %v861
        %v870 = vpack.c.b16 %v862, %v862
        %v871 = vpack.c.b16 %v863, %v863
        %v872 = vpack.c.b16 %v864, %v864
        %s881 = scalar_lea.vmem %s217, 256 [#allocation6]
        %882 = vst.msk [vmem:[%s881] sm:$0xf] %vm383, %v865
        %883 = vst.msk [vmem:[%s881 + $0x4] sm:$0xf] %vm383, %v866
        %884 = vst.msk [vmem:[%s881 + $0x8] sm:$0xf] %vm383, %v867
        %885 = vst.msk [vmem:[%s881 + $0xc] sm:$0xf] %vm383, %v868
        %886 = vst.msk [vmem:[%s881 + $0x10] sm:$0xf] %vm383, %v869
        %887 = vst.msk [vmem:[%s881 + $0x14] sm:$0xf] %vm383, %v870
        %888 = vst.msk [vmem:[%s881 + $0x18] sm:$0xf] %vm383, %v871
        %889 = vst.msk [vmem:[%s881 + $0x1c] sm:$0xf] %vm383, %v872
        %890 = vrot.lane.b32.xlu0 %v865, 112
        %v891 = vpop.permute.xlu0 %890
        %892 = vrot.lane.b32.xlu0 %v866, 112
        %v893 = vpop.permute.xlu0 %892
        %894 = vrot.lane.b32.xlu0 %v867, 112
        %v895 = vpop.permute.xlu0 %894
        %896 = vrot.lane.b32.xlu0 %v868, 112
        %v897 = vpop.permute.xlu0 %896
        %898 = vrot.lane.b32.xlu0 %v869, 112
        %v899 = vpop.permute.xlu0 %898
        %900 = vrot.lane.b32.xlu0 %v870, 112
        %v901 = vpop.permute.xlu0 %900
        %902 = vrot.lane.b32.xlu0 %v871, 112
        %v903 = vpop.permute.xlu0 %902
        %904 = vrot.lane.b32.xlu0 %v872, 112
        %v905 = vpop.permute.xlu0 %904
        %s914 = scalar_lea.vmem %s217, 288 [#allocation6]
        %915 = vst.msk [vmem:[%s914] sm:$0xf] %vm383, %v891
        %916 = vst.msk [vmem:[%s914 + $0x4] sm:$0xf] %vm383, %v893
        %917 = vst.msk [vmem:[%s914 + $0x8] sm:$0xf] %vm383, %v895
        %918 = vst.msk [vmem:[%s914 + $0xc] sm:$0xf] %vm383, %v897
        %919 = vst.msk [vmem:[%s914 + $0x10] sm:$0xf] %vm383, %v899
        %920 = vst.msk [vmem:[%s914 + $0x14] sm:$0xf] %vm383, %v901
        %921 = vst.msk [vmem:[%s914 + $0x18] sm:$0xf] %vm383, %v903
        %922 = vst.msk [vmem:[%s914 + $0x1c] sm:$0xf] %vm383, %v905
        %923 = vrot.lane.b32.xlu0 %v865, 96
        %v924 = vpop.permute.xlu0 %923
        %925 = vrot.lane.b32.xlu0 %v866, 96
        %v926 = vpop.permute.xlu0 %925
        %927 = vrot.lane.b32.xlu0 %v867, 96
        %v928 = vpop.permute.xlu0 %927
        %929 = vrot.lane.b32.xlu0 %v868, 96
        %v930 = vpop.permute.xlu0 %929
        %931 = vrot.lane.b32.xlu0 %v869, 96
        %v932 = vpop.permute.xlu0 %931
        %933 = vrot.lane.b32.xlu0 %v870, 96
        %v934 = vpop.permute.xlu0 %933
        %935 = vrot.lane.b32.xlu0 %v871, 96
        %v936 = vpop.permute.xlu0 %935
        %937 = vrot.lane.b32.xlu0 %v872, 96
        %v938 = vpop.permute.xlu0 %937
        %s947 = scalar_lea.vmem %s217, 320 [#allocation6]
        %948 = vst.msk [vmem:[%s947] sm:$0xf] %vm383, %v924
        %949 = vst.msk [vmem:[%s947 + $0x4] sm:$0xf] %vm383, %v926
        %950 = vst.msk [vmem:[%s947 + $0x8] sm:$0xf] %vm383, %v928
        %951 = vst.msk [vmem:[%s947 + $0xc] sm:$0xf] %vm383, %v930
        %952 = vst.msk [vmem:[%s947 + $0x10] sm:$0xf] %vm383, %v932
        %953 = vst.msk [vmem:[%s947 + $0x14] sm:$0xf] %vm383, %v934
        %954 = vst.msk [vmem:[%s947 + $0x18] sm:$0xf] %vm383, %v936
        %955 = vst.msk [vmem:[%s947 + $0x1c] sm:$0xf] %vm383, %v938
        %956 = vrot.lane.b32.xlu0 %v865, 80
        %v957 = vpop.permute.xlu0 %956
        %958 = vrot.lane.b32.xlu0 %v866, 80
        %v959 = vpop.permute.xlu0 %958
        %960 = vrot.lane.b32.xlu0 %v867, 80
        %v961 = vpop.permute.xlu0 %960
        %962 = vrot.lane.b32.xlu0 %v868, 80
        %v963 = vpop.permute.xlu0 %962
        %964 = vrot.lane.b32.xlu0 %v869, 80
        %v965 = vpop.permute.xlu0 %964
        %966 = vrot.lane.b32.xlu0 %v870, 80
        %v967 = vpop.permute.xlu0 %966
        %968 = vrot.lane.b32.xlu0 %v871, 80
        %v969 = vpop.permute.xlu0 %968
        %970 = vrot.lane.b32.xlu0 %v872, 80
        %v971 = vpop.permute.xlu0 %970
        %s980 = scalar_lea.vmem %s217, 352 [#allocation6]
        %981 = vst.msk [vmem:[%s980] sm:$0xf] %vm383, %v957
        %982 = vst.msk [vmem:[%s980 + $0x4] sm:$0xf] %vm383, %v959
        %983 = vst.msk [vmem:[%s980 + $0x8] sm:$0xf] %vm383, %v961
        %984 = vst.msk [vmem:[%s980 + $0xc] sm:$0xf] %vm383, %v963
        %985 = vst.msk [vmem:[%s980 + $0x10] sm:$0xf] %vm383, %v965
        %986 = vst.msk [vmem:[%s980 + $0x14] sm:$0xf] %vm383, %v967
        %987 = vst.msk [vmem:[%s980 + $0x18] sm:$0xf] %vm383, %v969
        %988 = vst.msk [vmem:[%s980 + $0x1c] sm:$0xf] %vm383, %v971
        %s989 = sand.u32 %s110, 1
        %s990 = sand.u32 %s110, 1
        %s991 = smul.addr %s990, 384
        %s992 = scalar_lea.vmem [#allocation6], %s991
        // Predicated region
        $region41: #{tpu_custom_call.1} parent=31 // pred_check
          %p993 = pneg %p120
        $region42: #{tpu_custom_call.1} parent=31 // pred_check_branch
          %995 = sbr.rel (%p993) target = $region44
        $region43: #{tpu_custom_call.1} parent=31 // pred_region
          %s996 = smul.u32 4, %s22
          %s997 = smul.u32 8, %s23
          %s998 = smul.addr %s996, 8
          %s999 = sadd.s32 %s997, %s998
          %s1000 = smul.addr %s999, 4
          %s1001 = scalar_lea.vmem %s3, %s1000
          // Predicated region
          $region45: #{tpu_custom_call.1} parent=43 // pred_check
            _
          $region46: #{tpu_custom_call.1} parent=43 // pred_check_branch
            %1003 = sbr.rel (0) target = $region48
          $region47: #{tpu_custom_call.1} parent=43 // pred_region
            // Predicated region
            $region49: #{tpu_custom_call.1} parent=47 // pred_check
              _
            $region50: #{tpu_custom_call.1} parent=47 // pred_check_branch
              %1005 = sbr.rel target = $region52
            $region51: #{tpu_custom_call.1} parent=47 // pred_region
              // Predicated region
              $region64: #{tpu_custom_call.1} parent=51 // pred_check
                _
              $region65: #{tpu_custom_call.1} parent=51 // pred_check_branch
                %1210 = sbr.rel (0) target = $region67
              $region66: #{tpu_custom_call.1} parent=51 // pred_region
                loop: start=0, step=1, limit=1
                $region68: #{tpu_custom_call.1} parent=66 // loop_pre_header
                  _
                $region69: #{tpu_custom_call.1} parent=66 // loop_header
                  %s1212 = sphi 0, %s1216
                  %p1213 = scmp.ge.s32.totalorder %s1212, 1
                  %s1217 = sphi %s992, %s992
                  %s1218 = sphi %s1001, %s1001
                $region70: #{tpu_custom_call.1} parent=66 // loop_header_branch
                  %1215 = sbr.rel (%p1213) target = $region74
                $region71: #{tpu_custom_call.1} parent=66 // loop_body
                  _
                $region72: #{tpu_custom_call.1} parent=66 // loop_footer
                  %s1216 = sadd.s32 1, %s1212
                $region73: #{tpu_custom_call.1} parent=66 // loop_footer_branch
                  %1211 = sbr.rel target = $region69
                $region74: #{tpu_custom_call.1} parent=66 // loop_exit
                  _
                loop: start=0, step=1, limit=1
                $region75: #{tpu_custom_call.1} parent=66 // loop_pre_header
                  _
                $region76: #{tpu_custom_call.1} parent=66 // loop_header
                  %s1221 = sphi 0, %s1225
                  %p1222 = scmp.ge.s32.totalorder %s1221, 1
                  %s1226 = sphi %s992, %s992
                  %s1227 = sphi %s1001, %s1001
                $region77: #{tpu_custom_call.1} parent=66 // loop_header_branch
                  %1224 = sbr.rel (%p1222) target = $region81
                $region78: #{tpu_custom_call.1} parent=66 // loop_body
                  %v1228 = vld [vmem:[%s1226] sm:$0xf]
                  %1229 = vst [vmem:[%s1227] sm:$0xf] %v1228
                  %v1230 = vld [vmem:[%s1226 + $0x4] sm:$0xf]
                  %1231 = vst [vmem:[%s1227 + $0x4] sm:$0xf] %v1230
                  %v1232 = vld [vmem:[%s1226 + $0x8] sm:$0xf]
                  %1233 = vst [vmem:[%s1227 + $0x8] sm:$0xf] %v1232
                  %v1234 = vld [vmem:[%s1226 + $0xc] sm:$0xf]
                  %1235 = vst [vmem:[%s1227 + $0xc] sm:$0xf] %v1234
                  %v1236 = vld [vmem:[%s1226 + $0x10] sm:$0xf]
                  %1237 = vst [vmem:[%s1227 + $0x10] sm:$0xf] %v1236
                  %v1238 = vld [vmem:[%s1226 + $0x14] sm:$0xf]
                  %1239 = vst [vmem:[%s1227 + $0x14] sm:$0xf] %v1238
                  %v1240 = vld [vmem:[%s1226 + $0x18] sm:$0xf]
                  %1241 = vst [vmem:[%s1227 + $0x18] sm:$0xf] %v1240
                  %v1242 = vld [vmem:[%s1226 + $0x1c] sm:$0xf]
                  %1243 = vst [vmem:[%s1227 + $0x1c] sm:$0xf] %v1242
                  %v1244 = vld [vmem:[%s1226 + $0x20] sm:$0xf]
                  %1245 = vst [vmem:[%s1227 + $0x20] sm:$0xf] %v1244
                  %v1246 = vld [vmem:[%s1226 + $0x24] sm:$0xf]
                  %1247 = vst [vmem:[%s1227 + $0x24] sm:$0xf] %v1246
                  %v1248 = vld [vmem:[%s1226 + $0x28] sm:$0xf]
                  %1249 = vst [vmem:[%s1227 + $0x28] sm:$0xf] %v1248
                  %v1250 = vld [vmem:[%s1226 + $0x2c] sm:$0xf]
                  %1251 = vst [vmem:[%s1227 + $0x2c] sm:$0xf] %v1250
                  %v1252 = vld [vmem:[%s1226 + $0x30] sm:$0xf]
                  %1253 = vst [vmem:[%s1227 + $0x30] sm:$0xf] %v1252
                  %v1254 = vld [vmem:[%s1226 + $0x34] sm:$0xf]
                  %1255 = vst [vmem:[%s1227 + $0x34] sm:$0xf] %v1254
                  %v1256 = vld [vmem:[%s1226 + $0x38] sm:$0xf]
                  %1257 = vst [vmem:[%s1227 + $0x38] sm:$0xf] %v1256
                  %v1258 = vld [vmem:[%s1226 + $0x3c] sm:$0xf]
                  %1259 = vst [vmem:[%s1227 + $0x3c] sm:$0xf] %v1258
                  %v1260 = vld [vmem:[%s1226 + $0x40] sm:$0xf]
                  %1261 = vst [vmem:[%s1227 + $0x40] sm:$0xf] %v1260
                  %v1262 = vld [vmem:[%s1226 + $0x44] sm:$0xf]
                  %1263 = vst [vmem:[%s1227 + $0x44] sm:$0xf] %v1262
                  %v1264 = vld [vmem:[%s1226 + $0x48] sm:$0xf]
                  %1265 = vst [vmem:[%s1227 + $0x48] sm:$0xf] %v1264
                  %v1266 = vld [vmem:[%s1226 + $0x4c] sm:$0xf]
                  %1267 = vst [vmem:[%s1227 + $0x4c] sm:$0xf] %v1266
                  %v1268 = vld [vmem:[%s1226 + $0x50] sm:$0xf]
                  %1269 = vst [vmem:[%s1227 + $0x50] sm:$0xf] %v1268
                  %v1270 = vld [vmem:[%s1226 + $0x54] sm:$0xf]
                  %1271 = vst [vmem:[%s1227 + $0x54] sm:$0xf] %v1270
                  %v1272 = vld [vmem:[%s1226 + $0x58] sm:$0xf]
                  %1273 = vst [vmem:[%s1227 + $0x58] sm:$0xf] %v1272
                  %v1274 = vld [vmem:[%s1226 + $0x5c] sm:$0xf]
                  %1275 = vst [vmem:[%s1227 + $0x5c] sm:$0xf] %v1274
                  %v1276 = vld [vmem:[%s1226 + $0x60] sm:$0xf]
                  %1277 = vst [vmem:[%s1227 + $0x60] sm:$0xf] %v1276
                  %v1278 = vld [vmem:[%s1226 + $0x64] sm:$0xf]
                  %1279 = vst [vmem:[%s1227 + $0x64] sm:$0xf] %v1278
                  %v1280 = vld [vmem:[%s1226 + $0x68] sm:$0xf]
                  %1281 = vst [vmem:[%s1227 + $0x68] sm:$0xf] %v1280
                  %v1282 = vld [vmem:[%s1226 + $0x6c] sm:$0xf]
                  %1283 = vst [vmem:[%s1227 + $0x6c] sm:$0xf] %v1282
                  %v1284 = vld [vmem:[%s1226 + $0x70] sm:$0xf]
                  %1285 = vst [vmem:[%s1227 + $0x70] sm:$0xf] %v1284
                  %v1286 = vld [vmem:[%s1226 + $0x74] sm:$0xf]
                  %1287 = vst [vmem:[%s1227 + $0x74] sm:$0xf] %v1286
                  %v1288 = vld [vmem:[%s1226 + $0x78] sm:$0xf]
                  %1289 = vst [vmem:[%s1227 + $0x78] sm:$0xf] %v1288
                  %v1290 = vld [vmem:[%s1226 + $0x7c] sm:$0xf]
                  %1291 = vst [vmem:[%s1227 + $0x7c] sm:$0xf] %v1290
                  %v1292 = vld [vmem:[%s1226 + $0x80] sm:$0xf]
                  %1293 = vst [vmem:[%s1227 + $0x100] sm:$0xf] %v1292
                  %v1294 = vld [vmem:[%s1226 + $0x84] sm:$0xf]
                  %1295 = vst [vmem:[%s1227 + $0x104] sm:$0xf] %v1294
                  %v1296 = vld [vmem:[%s1226 + $0x88] sm:$0xf]
                  %1297 = vst [vmem:[%s1227 + $0x108] sm:$0xf] %v1296
                  %v1298 = vld [vmem:[%s1226 + $0x8c] sm:$0xf]
                  %1299 = vst [vmem:[%s1227 + $0x10c] sm:$0xf] %v1298
                  %v1300 = vld [vmem:[%s1226 + $0x90] sm:$0xf]
                  %1301 = vst [vmem:[%s1227 + $0x110] sm:$0xf] %v1300
                  %v1302 = vld [vmem:[%s1226 + $0x94] sm:$0xf]
                  %1303 = vst [vmem:[%s1227 + $0x114] sm:$0xf] %v1302
                  %v1304 = vld [vmem:[%s1226 + $0x98] sm:$0xf]
                  %1305 = vst [vmem:[%s1227 + $0x118] sm:$0xf] %v1304
                  %v1306 = vld [vmem:[%s1226 + $0x9c] sm:$0xf]
                  %1307 = vst [vmem:[%s1227 + $0x11c] sm:$0xf] %v1306
                  %v1308 = vld [vmem:[%s1226 + $0xa0] sm:$0xf]
                  %1309 = vst [vmem:[%s1227 + $0x120] sm:$0xf] %v1308
                  %v1310 = vld [vmem:[%s1226 + $0xa4] sm:$0xf]
                  %1311 = vst [vmem:[%s1227 + $0x124] sm:$0xf] %v1310
                  %v1312 = vld [vmem:[%s1226 + $0xa8] sm:$0xf]
                  %1313 = vst [vmem:[%s1227 + $0x128] sm:$0xf] %v1312
                  %v1314 = vld [vmem:[%s1226 + $0xac] sm:$0xf]
                  %1315 = vst [vmem:[%s1227 + $0x12c] sm:$0xf] %v1314
                  %v1316 = vld [vmem:[%s1226 + $0xb0] sm:$0xf]
                  %1317 = vst [vmem:[%s1227 + $0x130] sm:$0xf] %v1316
                  %v1318 = vld [vmem:[%s1226 + $0xb4] sm:$0xf]
                  %1319 = vst [vmem:[%s1227 + $0x134] sm:$0xf] %v1318
                  %v1320 = vld [vmem:[%s1226 + $0xb8] sm:$0xf]
                  %1321 = vst [vmem:[%s1227 + $0x138] sm:$0xf] %v1320
                  %v1322 = vld [vmem:[%s1226 + $0xbc] sm:$0xf]
                  %1323 = vst [vmem:[%s1227 + $0x13c] sm:$0xf] %v1322
                  %v1324 = vld [vmem:[%s1226 + $0xc0] sm:$0xf]
                  %1325 = vst [vmem:[%s1227 + $0x140] sm:$0xf] %v1324
                  %v1326 = vld [vmem:[%s1226 + $0xc4] sm:$0xf]
                  %1327 = vst [vmem:[%s1227 + $0x144] sm:$0xf] %v1326
                  %v1328 = vld [vmem:[%s1226 + $0xc8] sm:$0xf]
                  %1329 = vst [vmem:[%s1227 + $0x148] sm:$0xf] %v1328
                  %v1330 = vld [vmem:[%s1226 + $0xcc] sm:$0xf]
                  %1331 = vst [vmem:[%s1227 + $0x14c] sm:$0xf] %v1330
                  %v1332 = vld [vmem:[%s1226 + $0xd0] sm:$0xf]
                  %1333 = vst [vmem:[%s1227 + $0x150] sm:$0xf] %v1332
                  %v1334 = vld [vmem:[%s1226 + $0xd4] sm:$0xf]
                  %1335 = vst [vmem:[%s1227 + $0x154] sm:$0xf] %v1334
                  %v1336 = vld [vmem:[%s1226 + $0xd8] sm:$0xf]
                  %1337 = vst [vmem:[%s1227 + $0x158] sm:$0xf] %v1336
                  %v1338 = vld [vmem:[%s1226 + $0xdc] sm:$0xf]
                  %1339 = vst [vmem:[%s1227 + $0x15c] sm:$0xf] %v1338
                  %v1340 = vld [vmem:[%s1226 + $0xe0] sm:$0xf]
                  %1341 = vst [vmem:[%s1227 + $0x160] sm:$0xf] %v1340
                  %v1342 = vld [vmem:[%s1226 + $0xe4] sm:$0xf]
                  %1343 = vst [vmem:[%s1227 + $0x164] sm:$0xf] %v1342
                  %v1344 = vld [vmem:[%s1226 + $0xe8] sm:$0xf]
                  %1345 = vst [vmem:[%s1227 + $0x168] sm:$0xf] %v1344
                  %v1346 = vld [vmem:[%s1226 + $0xec] sm:$0xf]
                  %1347 = vst [vmem:[%s1227 + $0x16c] sm:$0xf] %v1346
                  %v1348 = vld [vmem:[%s1226 + $0xf0] sm:$0xf]
                  %1349 = vst [vmem:[%s1227 + $0x170] sm:$0xf] %v1348
                  %v1350 = vld [vmem:[%s1226 + $0xf4] sm:$0xf]
                  %1351 = vst [vmem:[%s1227 + $0x174] sm:$0xf] %v1350
                  %v1352 = vld [vmem:[%s1226 + $0xf8] sm:$0xf]
                  %1353 = vst [vmem:[%s1227 + $0x178] sm:$0xf] %v1352
                  %v1354 = vld [vmem:[%s1226 + $0xfc] sm:$0xf]
                  %1355 = vst [vmem:[%s1227 + $0x17c] sm:$0xf] %v1354
                  %v1356 = vld [vmem:[%s1226 + $0x100] sm:$0xf]
                  %1357 = vst [vmem:[%s1227 + $0x200] sm:$0xf] %v1356
                  %v1358 = vld [vmem:[%s1226 + $0x104] sm:$0xf]
                  %1359 = vst [vmem:[%s1227 + $0x204] sm:$0xf] %v1358
                  %v1360 = vld [vmem:[%s1226 + $0x108] sm:$0xf]
                  %1361 = vst [vmem:[%s1227 + $0x208] sm:$0xf] %v1360
                  %v1362 = vld [vmem:[%s1226 + $0x10c] sm:$0xf]
                  %1363 = vst [vmem:[%s1227 + $0x20c] sm:$0xf] %v1362
                  %v1364 = vld [vmem:[%s1226 + $0x110] sm:$0xf]
                  %1365 = vst [vmem:[%s1227 + $0x210] sm:$0xf] %v1364
                  %v1366 = vld [vmem:[%s1226 + $0x114] sm:$0xf]
                  %1367 = vst [vmem:[%s1227 + $0x214] sm:$0xf] %v1366
                  %v1368 = vld [vmem:[%s1226 + $0x118] sm:$0xf]
                  %1369 = vst [vmem:[%s1227 + $0x218] sm:$0xf] %v1368
                  %v1370 = vld [vmem:[%s1226 + $0x11c] sm:$0xf]
                  %1371 = vst [vmem:[%s1227 + $0x21c] sm:$0xf] %v1370
                  %v1372 = vld [vmem:[%s1226 + $0x120] sm:$0xf]
                  %1373 = vst [vmem:[%s1227 + $0x220] sm:$0xf] %v1372
                  %v1374 = vld [vmem:[%s1226 + $0x124] sm:$0xf]
                  %1375 = vst [vmem:[%s1227 + $0x224] sm:$0xf] %v1374
                  %v1376 = vld [vmem:[%s1226 + $0x128] sm:$0xf]
                  %1377 = vst [vmem:[%s1227 + $0x228] sm:$0xf] %v1376
                  %v1378 = vld [vmem:[%s1226 + $0x12c] sm:$0xf]
                  %1379 = vst [vmem:[%s1227 + $0x22c] sm:$0xf] %v1378
                  %v1380 = vld [vmem:[%s1226 + $0x130] sm:$0xf]
                  %1381 = vst [vmem:[%s1227 + $0x230] sm:$0xf] %v1380
                  %v1382 = vld [vmem:[%s1226 + $0x134] sm:$0xf]
                  %1383 = vst [vmem:[%s1227 + $0x234] sm:$0xf] %v1382
                  %v1384 = vld [vmem:[%s1226 + $0x138] sm:$0xf]
                  %1385 = vst [vmem:[%s1227 + $0x238] sm:$0xf] %v1384
                  %v1386 = vld [vmem:[%s1226 + $0x13c] sm:$0xf]
                  %1387 = vst [vmem:[%s1227 + $0x23c] sm:$0xf] %v1386
                  %v1388 = vld [vmem:[%s1226 + $0x140] sm:$0xf]
                  %1389 = vst [vmem:[%s1227 + $0x240] sm:$0xf] %v1388
                  %v1390 = vld [vmem:[%s1226 + $0x144] sm:$0xf]
                  %1391 = vst [vmem:[%s1227 + $0x244] sm:$0xf] %v1390
                  %v1392 = vld [vmem:[%s1226 + $0x148] sm:$0xf]
                  %1393 = vst [vmem:[%s1227 + $0x248] sm:$0xf] %v1392
                  %v1394 = vld [vmem:[%s1226 + $0x14c] sm:$0xf]
                  %1395 = vst [vmem:[%s1227 + $0x24c] sm:$0xf] %v1394
                  %v1396 = vld [vmem:[%s1226 + $0x150] sm:$0xf]
                  %1397 = vst [vmem:[%s1227 + $0x250] sm:$0xf] %v1396
                  %v1398 = vld [vmem:[%s1226 + $0x154] sm:$0xf]
                  %1399 = vst [vmem:[%s1227 + $0x254] sm:$0xf] %v1398
                  %v1400 = vld [vmem:[%s1226 + $0x158] sm:$0xf]
                  %1401 = vst [vmem:[%s1227 + $0x258] sm:$0xf] %v1400
                  %v1402 = vld [vmem:[%s1226 + $0x15c] sm:$0xf]
                  %1403 = vst [vmem:[%s1227 + $0x25c] sm:$0xf] %v1402
                  %v1404 = vld [vmem:[%s1226 + $0x160] sm:$0xf]
                  %1405 = vst [vmem:[%s1227 + $0x260] sm:$0xf] %v1404
                  %v1406 = vld [vmem:[%s1226 + $0x164] sm:$0xf]
                  %1407 = vst [vmem:[%s1227 + $0x264] sm:$0xf] %v1406
                  %v1408 = vld [vmem:[%s1226 + $0x168] sm:$0xf]
                  %1409 = vst [vmem:[%s1227 + $0x268] sm:$0xf] %v1408
                  %v1410 = vld [vmem:[%s1226 + $0x16c] sm:$0xf]
                  %1411 = vst [vmem:[%s1227 + $0x26c] sm:$0xf] %v1410
                  %v1412 = vld [vmem:[%s1226 + $0x170] sm:$0xf]
                  %1413 = vst [vmem:[%s1227 + $0x270] sm:$0xf] %v1412
                  %v1414 = vld [vmem:[%s1226 + $0x174] sm:$0xf]
                  %1415 = vst [vmem:[%s1227 + $0x274] sm:$0xf] %v1414
                  %v1416 = vld [vmem:[%s1226 + $0x178] sm:$0xf]
                  %1417 = vst [vmem:[%s1227 + $0x278] sm:$0xf] %v1416
                  %v1418 = vld [vmem:[%s1226 + $0x17c] sm:$0xf]
                  %1419 = vst [vmem:[%s1227 + $0x27c] sm:$0xf] %v1418
                $region79: #{tpu_custom_call.1} parent=66 // loop_footer
                  %s1225 = sadd.s32 1, %s1221
                $region80: #{tpu_custom_call.1} parent=66 // loop_footer_branch
                  %1220 = sbr.rel target = $region76
                $region81: #{tpu_custom_call.1} parent=66 // loop_exit
                  _
              $region67: #{tpu_custom_call.1} parent=51 // pred_fallthru
                _
            $region52: #{tpu_custom_call.1} parent=47 // pred_fallthru
              _
            // Predicated region
            $region53: #{tpu_custom_call.1} parent=47 // pred_check
              _
            $region54: #{tpu_custom_call.1} parent=47 // pred_check_branch
              %1007 = sbr.rel (0) target = $region56
            $region55: #{tpu_custom_call.1} parent=47 // pred_region
              loop: start=0, step=1, limit=1
              $region57: #{tpu_custom_call.1} parent=55 // loop_pre_header
                _
              $region58: #{tpu_custom_call.1} parent=55 // loop_header
                %s1010 = sphi 0, %s1014
                %p1011 = scmp.ge.s32.totalorder %s1010, 1
                %s1015 = sphi %s992, %s992
                %s1016 = sphi %s1001, %s1001
              $region59: #{tpu_custom_call.1} parent=55 // loop_header_branch
                %1013 = sbr.rel (%p1011) target = $region63
              $region60: #{tpu_custom_call.1} parent=55 // loop_body
                %v1017 = vld [vmem:[%s1015] sm:$0xf]
                %1018 = vst [vmem:[%s1016] sm:$0xf] %v1017
                %v1019 = vld [vmem:[%s1015 + $0x4] sm:$0xf]
                %1020 = vst [vmem:[%s1016 + $0x4] sm:$0xf] %v1019
                %v1021 = vld [vmem:[%s1015 + $0x8] sm:$0xf]
                %1022 = vst [vmem:[%s1016 + $0x8] sm:$0xf] %v1021
                %v1023 = vld [vmem:[%s1015 + $0xc] sm:$0xf]
                %1024 = vst [vmem:[%s1016 + $0xc] sm:$0xf] %v1023
                %v1025 = vld [vmem:[%s1015 + $0x10] sm:$0xf]
                %1026 = vst [vmem:[%s1016 + $0x10] sm:$0xf] %v1025
                %v1027 = vld [vmem:[%s1015 + $0x14] sm:$0xf]
                %1028 = vst [vmem:[%s1016 + $0x14] sm:$0xf] %v1027
                %v1029 = vld [vmem:[%s1015 + $0x18] sm:$0xf]
                %1030 = vst [vmem:[%s1016 + $0x18] sm:$0xf] %v1029
                %v1031 = vld [vmem:[%s1015 + $0x1c] sm:$0xf]
                %1032 = vst [vmem:[%s1016 + $0x1c] sm:$0xf] %v1031
                %v1033 = vld [vmem:[%s1015 + $0x20] sm:$0xf]
                %1034 = vst [vmem:[%s1016 + $0x20] sm:$0xf] %v1033
                %v1035 = vld [vmem:[%s1015 + $0x24] sm:$0xf]
                %1036 = vst [vmem:[%s1016 + $0x24] sm:$0xf] %v1035
                %v1037 = vld [vmem:[%s1015 + $0x28] sm:$0xf]
                %1038 = vst [vmem:[%s1016 + $0x28] sm:$0xf] %v1037
                %v1039 = vld [vmem:[%s1015 + $0x2c] sm:$0xf]
                %1040 = vst [vmem:[%s1016 + $0x2c] sm:$0xf] %v1039
                %v1041 = vld [vmem:[%s1015 + $0x30] sm:$0xf]
                %1042 = vst [vmem:[%s1016 + $0x30] sm:$0xf] %v1041
                %v1043 = vld [vmem:[%s1015 + $0x34] sm:$0xf]
                %1044 = vst [vmem:[%s1016 + $0x34] sm:$0xf] %v1043
                %v1045 = vld [vmem:[%s1015 + $0x38] sm:$0xf]
                %1046 = vst [vmem:[%s1016 + $0x38] sm:$0xf] %v1045
                %v1047 = vld [vmem:[%s1015 + $0x3c] sm:$0xf]
                %1048 = vst [vmem:[%s1016 + $0x3c] sm:$0xf] %v1047
                %v1049 = vld [vmem:[%s1015 + $0x40] sm:$0xf]
                %1050 = vst [vmem:[%s1016 + $0x40] sm:$0xf] %v1049
                %v1051 = vld [vmem:[%s1015 + $0x44] sm:$0xf]
                %1052 = vst [vmem:[%s1016 + $0x44] sm:$0xf] %v1051
                %v1053 = vld [vmem:[%s1015 + $0x48] sm:$0xf]
                %1054 = vst [vmem:[%s1016 + $0x48] sm:$0xf] %v1053
                %v1055 = vld [vmem:[%s1015 + $0x4c] sm:$0xf]
                %1056 = vst [vmem:[%s1016 + $0x4c] sm:$0xf] %v1055
                %v1057 = vld [vmem:[%s1015 + $0x50] sm:$0xf]
                %1058 = vst [vmem:[%s1016 + $0x50] sm:$0xf] %v1057
                %v1059 = vld [vmem:[%s1015 + $0x54] sm:$0xf]
                %1060 = vst [vmem:[%s1016 + $0x54] sm:$0xf] %v1059
                %v1061 = vld [vmem:[%s1015 + $0x58] sm:$0xf]
                %1062 = vst [vmem:[%s1016 + $0x58] sm:$0xf] %v1061
                %v1063 = vld [vmem:[%s1015 + $0x5c] sm:$0xf]
                %1064 = vst [vmem:[%s1016 + $0x5c] sm:$0xf] %v1063
                %v1065 = vld [vmem:[%s1015 + $0x60] sm:$0xf]
                %1066 = vst [vmem:[%s1016 + $0x60] sm:$0xf] %v1065
                %v1067 = vld [vmem:[%s1015 + $0x64] sm:$0xf]
                %1068 = vst [vmem:[%s1016 + $0x64] sm:$0xf] %v1067
                %v1069 = vld [vmem:[%s1015 + $0x68] sm:$0xf]
                %1070 = vst [vmem:[%s1016 + $0x68] sm:$0xf] %v1069
                %v1071 = vld [vmem:[%s1015 + $0x6c] sm:$0xf]
                %1072 = vst [vmem:[%s1016 + $0x6c] sm:$0xf] %v1071
                %v1073 = vld [vmem:[%s1015 + $0x70] sm:$0xf]
                %1074 = vst [vmem:[%s1016 + $0x70] sm:$0xf] %v1073
                %v1075 = vld [vmem:[%s1015 + $0x74] sm:$0xf]
                %1076 = vst [vmem:[%s1016 + $0x74] sm:$0xf] %v1075
                %v1077 = vld [vmem:[%s1015 + $0x78] sm:$0xf]
                %1078 = vst [vmem:[%s1016 + $0x78] sm:$0xf] %v1077
                %v1079 = vld [vmem:[%s1015 + $0x7c] sm:$0xf]
                %1080 = vst [vmem:[%s1016 + $0x7c] sm:$0xf] %v1079
                %v1081 = vld [vmem:[%s1015 + $0x80] sm:$0xf]
                %1082 = vst [vmem:[%s1016 + $0x100] sm:$0xf] %v1081
                %v1083 = vld [vmem:[%s1015 + $0x84] sm:$0xf]
                %1084 = vst [vmem:[%s1016 + $0x104] sm:$0xf] %v1083
                %v1085 = vld [vmem:[%s1015 + $0x88] sm:$0xf]
                %1086 = vst [vmem:[%s1016 + $0x108] sm:$0xf] %v1085
                %v1087 = vld [vmem:[%s1015 + $0x8c] sm:$0xf]
                %1088 = vst [vmem:[%s1016 + $0x10c] sm:$0xf] %v1087
                %v1089 = vld [vmem:[%s1015 + $0x90] sm:$0xf]
                %1090 = vst [vmem:[%s1016 + $0x110] sm:$0xf] %v1089
                %v1091 = vld [vmem:[%s1015 + $0x94] sm:$0xf]
                %1092 = vst [vmem:[%s1016 + $0x114] sm:$0xf] %v1091
                %v1093 = vld [vmem:[%s1015 + $0x98] sm:$0xf]
                %1094 = vst [vmem:[%s1016 + $0x118] sm:$0xf] %v1093
                %v1095 = vld [vmem:[%s1015 + $0x9c] sm:$0xf]
                %1096 = vst [vmem:[%s1016 + $0x11c] sm:$0xf] %v1095
                %v1097 = vld [vmem:[%s1015 + $0xa0] sm:$0xf]
                %1098 = vst [vmem:[%s1016 + $0x120] sm:$0xf] %v1097
                %v1099 = vld [vmem:[%s1015 + $0xa4] sm:$0xf]
                %1100 = vst [vmem:[%s1016 + $0x124] sm:$0xf] %v1099
                %v1101 = vld [vmem:[%s1015 + $0xa8] sm:$0xf]
                %1102 = vst [vmem:[%s1016 + $0x128] sm:$0xf] %v1101
                %v1103 = vld [vmem:[%s1015 + $0xac] sm:$0xf]
                %1104 = vst [vmem:[%s1016 + $0x12c] sm:$0xf] %v1103
                %v1105 = vld [vmem:[%s1015 + $0xb0] sm:$0xf]
                %1106 = vst [vmem:[%s1016 + $0x130] sm:$0xf] %v1105
                %v1107 = vld [vmem:[%s1015 + $0xb4] sm:$0xf]
                %1108 = vst [vmem:[%s1016 + $0x134] sm:$0xf] %v1107
                %v1109 = vld [vmem:[%s1015 + $0xb8] sm:$0xf]
                %1110 = vst [vmem:[%s1016 + $0x138] sm:$0xf] %v1109
                %v1111 = vld [vmem:[%s1015 + $0xbc] sm:$0xf]
                %1112 = vst [vmem:[%s1016 + $0x13c] sm:$0xf] %v1111
                %v1113 = vld [vmem:[%s1015 + $0xc0] sm:$0xf]
                %1114 = vst [vmem:[%s1016 + $0x140] sm:$0xf] %v1113
                %v1115 = vld [vmem:[%s1015 + $0xc4] sm:$0xf]
                %1116 = vst [vmem:[%s1016 + $0x144] sm:$0xf] %v1115
                %v1117 = vld [vmem:[%s1015 + $0xc8] sm:$0xf]
                %1118 = vst [vmem:[%s1016 + $0x148] sm:$0xf] %v1117
                %v1119 = vld [vmem:[%s1015 + $0xcc] sm:$0xf]
                %1120 = vst [vmem:[%s1016 + $0x14c] sm:$0xf] %v1119
                %v1121 = vld [vmem:[%s1015 + $0xd0] sm:$0xf]
                %1122 = vst [vmem:[%s1016 + $0x150] sm:$0xf] %v1121
                %v1123 = vld [vmem:[%s1015 + $0xd4] sm:$0xf]
                %1124 = vst [vmem:[%s1016 + $0x154] sm:$0xf] %v1123
                %v1125 = vld [vmem:[%s1015 + $0xd8] sm:$0xf]
                %1126 = vst [vmem:[%s1016 + $0x158] sm:$0xf] %v1125
                %v1127 = vld [vmem:[%s1015 + $0xdc] sm:$0xf]
                %1128 = vst [vmem:[%s1016 + $0x15c] sm:$0xf] %v1127
                %v1129 = vld [vmem:[%s1015 + $0xe0] sm:$0xf]
                %1130 = vst [vmem:[%s1016 + $0x160] sm:$0xf] %v1129
                %v1131 = vld [vmem:[%s1015 + $0xe4] sm:$0xf]
                %1132 = vst [vmem:[%s1016 + $0x164] sm:$0xf] %v1131
                %v1133 = vld [vmem:[%s1015 + $0xe8] sm:$0xf]
                %1134 = vst [vmem:[%s1016 + $0x168] sm:$0xf] %v1133
                %v1135 = vld [vmem:[%s1015 + $0xec] sm:$0xf]
                %1136 = vst [vmem:[%s1016 + $0x16c] sm:$0xf] %v1135
                %v1137 = vld [vmem:[%s1015 + $0xf0] sm:$0xf]
                %1138 = vst [vmem:[%s1016 + $0x170] sm:$0xf] %v1137
                %v1139 = vld [vmem:[%s1015 + $0xf4] sm:$0xf]
                %1140 = vst [vmem:[%s1016 + $0x174] sm:$0xf] %v1139
                %v1141 = vld [vmem:[%s1015 + $0xf8] sm:$0xf]
                %1142 = vst [vmem:[%s1016 + $0x178] sm:$0xf] %v1141
                %v1143 = vld [vmem:[%s1015 + $0xfc] sm:$0xf]
                %1144 = vst [vmem:[%s1016 + $0x17c] sm:$0xf] %v1143
                %v1145 = vld [vmem:[%s1015 + $0x100] sm:$0xf]
                %1146 = vst [vmem:[%s1016 + $0x200] sm:$0xf] %v1145
                %v1147 = vld [vmem:[%s1015 + $0x104] sm:$0xf]
                %1148 = vst [vmem:[%s1016 + $0x204] sm:$0xf] %v1147
                %v1149 = vld [vmem:[%s1015 + $0x108] sm:$0xf]
                %1150 = vst [vmem:[%s1016 + $0x208] sm:$0xf] %v1149
                %v1151 = vld [vmem:[%s1015 + $0x10c] sm:$0xf]
                %1152 = vst [vmem:[%s1016 + $0x20c] sm:$0xf] %v1151
                %v1153 = vld [vmem:[%s1015 + $0x110] sm:$0xf]
                %1154 = vst [vmem:[%s1016 + $0x210] sm:$0xf] %v1153
                %v1155 = vld [vmem:[%s1015 + $0x114] sm:$0xf]
                %1156 = vst [vmem:[%s1016 + $0x214] sm:$0xf] %v1155
                %v1157 = vld [vmem:[%s1015 + $0x118] sm:$0xf]
                %1158 = vst [vmem:[%s1016 + $0x218] sm:$0xf] %v1157
                %v1159 = vld [vmem:[%s1015 + $0x11c] sm:$0xf]
                %1160 = vst [vmem:[%s1016 + $0x21c] sm:$0xf] %v1159
                %v1161 = vld [vmem:[%s1015 + $0x120] sm:$0xf]
                %1162 = vst [vmem:[%s1016 + $0x220] sm:$0xf] %v1161
                %v1163 = vld [vmem:[%s1015 + $0x124] sm:$0xf]
                %1164 = vst [vmem:[%s1016 + $0x224] sm:$0xf] %v1163
                %v1165 = vld [vmem:[%s1015 + $0x128] sm:$0xf]
                %1166 = vst [vmem:[%s1016 + $0x228] sm:$0xf] %v1165
                %v1167 = vld [vmem:[%s1015 + $0x12c] sm:$0xf]
                %1168 = vst [vmem:[%s1016 + $0x22c] sm:$0xf] %v1167
                %v1169 = vld [vmem:[%s1015 + $0x130] sm:$0xf]
                %1170 = vst [vmem:[%s1016 + $0x230] sm:$0xf] %v1169
                %v1171 = vld [vmem:[%s1015 + $0x134] sm:$0xf]
                %1172 = vst [vmem:[%s1016 + $0x234] sm:$0xf] %v1171
                %v1173 = vld [vmem:[%s1015 + $0x138] sm:$0xf]
                %1174 = vst [vmem:[%s1016 + $0x238] sm:$0xf] %v1173
                %v1175 = vld [vmem:[%s1015 + $0x13c] sm:$0xf]
                %1176 = vst [vmem:[%s1016 + $0x23c] sm:$0xf] %v1175
                %v1177 = vld [vmem:[%s1015 + $0x140] sm:$0xf]
                %1178 = vst [vmem:[%s1016 + $0x240] sm:$0xf] %v1177
                %v1179 = vld [vmem:[%s1015 + $0x144] sm:$0xf]
                %1180 = vst [vmem:[%s1016 + $0x244] sm:$0xf] %v1179
                %v1181 = vld [vmem:[%s1015 + $0x148] sm:$0xf]
                %1182 = vst [vmem:[%s1016 + $0x248] sm:$0xf] %v1181
                %v1183 = vld [vmem:[%s1015 + $0x14c] sm:$0xf]
                %1184 = vst [vmem:[%s1016 + $0x24c] sm:$0xf] %v1183
                %v1185 = vld [vmem:[%s1015 + $0x150] sm:$0xf]
                %1186 = vst [vmem:[%s1016 + $0x250] sm:$0xf] %v1185
                %v1187 = vld [vmem:[%s1015 + $0x154] sm:$0xf]
                %1188 = vst [vmem:[%s1016 + $0x254] sm:$0xf] %v1187
                %v1189 = vld [vmem:[%s1015 + $0x158] sm:$0xf]
                %1190 = vst [vmem:[%s1016 + $0x258] sm:$0xf] %v1189
                %v1191 = vld [vmem:[%s1015 + $0x15c] sm:$0xf]
                %1192 = vst [vmem:[%s1016 + $0x25c] sm:$0xf] %v1191
                %v1193 = vld [vmem:[%s1015 + $0x160] sm:$0xf]
                %1194 = vst [vmem:[%s1016 + $0x260] sm:$0xf] %v1193
                %v1195 = vld [vmem:[%s1015 + $0x164] sm:$0xf]
                %1196 = vst [vmem:[%s1016 + $0x264] sm:$0xf] %v1195
                %v1197 = vld [vmem:[%s1015 + $0x168] sm:$0xf]
                %1198 = vst [vmem:[%s1016 + $0x268] sm:$0xf] %v1197
                %v1199 = vld [vmem:[%s1015 + $0x16c] sm:$0xf]
                %1200 = vst [vmem:[%s1016 + $0x26c] sm:$0xf] %v1199
                %v1201 = vld [vmem:[%s1015 + $0x170] sm:$0xf]
                %1202 = vst [vmem:[%s1016 + $0x270] sm:$0xf] %v1201
                %v1203 = vld [vmem:[%s1015 + $0x174] sm:$0xf]
                %1204 = vst [vmem:[%s1016 + $0x274] sm:$0xf] %v1203
                %v1205 = vld [vmem:[%s1015 + $0x178] sm:$0xf]
                %1206 = vst [vmem:[%s1016 + $0x278] sm:$0xf] %v1205
                %v1207 = vld [vmem:[%s1015 + $0x17c] sm:$0xf]
                %1208 = vst [vmem:[%s1016 + $0x27c] sm:$0xf] %v1207
              $region61: #{tpu_custom_call.1} parent=55 // loop_footer
                %s1014 = sadd.s32 1, %s1010
              $region62: #{tpu_custom_call.1} parent=55 // loop_footer_branch
                %1009 = sbr.rel target = $region58
              $region63: #{tpu_custom_call.1} parent=55 // loop_exit
                _
            $region56: #{tpu_custom_call.1} parent=47 // pred_fallthru
              _
          $region48: #{tpu_custom_call.1} parent=43 // pred_fallthru
            _
          %1420 = vnop
        $region44: #{tpu_custom_call.1} parent=31 // pred_fallthru
          _
      $region32: #{tpu_custom_call.1} parent=5 // pred_fallthru
        _
      %p1421 = scmp.le.s32.totalorder 2, %s13
      // Predicated region
      $region82: #{tpu_custom_call.1} parent=5 // pred_check
        %p1422 = pneg %p1421
      $region83: #{tpu_custom_call.1} parent=5 // pred_check_branch
        %1424 = sbr.rel (%p1422) target = $region85
      $region84: #{tpu_custom_call.1} parent=5 // pred_region
        %s1425 = ssub.s32 %s13, 2
        // Predicated region
        $region86: #{tpu_custom_call.1} parent=84 // pred_check
          %p1426 = pneg %p126
        $region87: #{tpu_custom_call.1} parent=84 // pred_check_branch
          %1428 = sbr.rel (%p1426) target = $region89
        $region88: #{tpu_custom_call.1} parent=84 // pred_region
          %s1429 = sand.u32 %s111, 1
          %s1430 = sand.u32 %s111, 1
          %s1431 = smul.addr %s1430, 384
          %s1432 = scalar_lea.vmem [#allocation6], %s1431
        $region89: #{tpu_custom_call.1} parent=84 // pred_fallthru
          _
      $region85: #{tpu_custom_call.1} parent=5 // pred_fallthru
        _
    $region6: #{tpu_custom_call.1} parent=1 // loop_footer
      %s17 = sadd.s32 1, %s13
    $region7: #{tpu_custom_call.1} parent=1 // loop_footer_branch
      %12 = sbr.rel target = $region3
    $region8: #{tpu_custom_call.1} parent=1 // loop_exit
      _
    %1433 = vsyncpa [#allocation3], 1
    %s1434 = scalar_lea.sflag [#allocation3], 1
    %1435 = vsyncpa %s1434, 1
    %1436 = vsyncpa [#allocation5], 1

</llo_original>
